<compile_context>
chip_gen: v7x
topology: tpu7x:2x2x1
jax: 0.10.0
libtpu: 0.0.40
codegen_flags: <defaults>
</compile_context>

<pallas_src>
import functools

import jax
import jax.numpy as jnp
from jax.experimental import pallas as pl
from jax.experimental.pallas import tpu as pltpu


# ----------------------------------------------------------------------------
# helpers
# ----------------------------------------------------------------------------

_C_PAD = 128  # lane-dense width for the num_classes-sized attention tensors


def _round_up(x, m):
    return ((x + m - 1) // m) * m


def _choose_tile_n(n_tokens, cap=2048):
    """Largest tile (multiple of 8, <= cap) that divides n_tokens; else pad."""
    best = None
    for t in range(8, min(cap, n_tokens) + 1, 8):
        if n_tokens % t == 0:
            best = t
    if best is not None:
        return best, n_tokens
    t = min(cap, _round_up(n_tokens, 8))
    return t, _round_up(n_tokens, t)


def _choose_chunk_rows(h, w, max_chunk=16384):
    """Rows per in-kernel conv chunk: divides H, chunk_rows*W <= max_chunk."""
    best = 1
    for r in range(1, h + 1):
        if h % r == 0 and r * w <= max_chunk:
            best = r
    return best


# ----------------------------------------------------------------------------
# Kernel 1: token backbone (patch-embed -> act -> global average pool)
# ----------------------------------------------------------------------------

def _token_backbone_kernel(x_ref, w1_ref, b1_ref, o_ref, acc_ref, *, act,
                           n_tokens, tile_n):
    """One (batch b, token-tile n) grid point.

    x_ref : (1, tile_n, K)  bf16 tokens (native K, no HBM padding)
    w1_ref: (K, E) bf16, b1_ref: (1, E) f32
    o_ref : (1, 1, E) f32  pooled embedding (written once, at the last tile)
    acc_ref: (1, E) f32 VMEM scratch accumulator
    """
    n = pl.program_id(1)

    @pl.when(n == 0)
    def _():
        acc_ref[...] = jnp.zeros_like(acc_ref)

    x = x_ref[0]                                                  # (tile_n, K)
    h = jnp.dot(x, w1_ref[...], preferred_element_type=jnp.float32)
    h = act(h + b1_ref[...])                                      # (tile_n, E) f32

    # GAP via the MXU: fold the valid-row mask into the ones LHS (handles the
    # padded final tile for free; it is all-ones when n_tokens % tile_n == 0).
    row = n * tile_n + jax.lax.broadcasted_iota(jnp.int32, (1, tile_n), 1)
    ones = (row < n_tokens).astype(jnp.float32)                   # (1, tile_n)
    acc_ref[...] += jnp.dot(ones, h, preferred_element_type=jnp.float32)

    @pl.when(n == pl.num_programs(1) - 1)
    def _():
        o_ref[...] = (acc_ref[...] * (1.0 / float(n_tokens)))[None]


def _token_backbone_forward(tokens, w1, b1, act):
    """tokens: (B, N, K) bf16 -> pooled embedding (B, E) f32."""
    B, n_tokens, K = tokens.shape
    E = w1.shape[1]
    tile_n, n_pad = _choose_tile_n(n_tokens)
    if n_pad != n_tokens:  # rare fallback; zero rows are masked out of the mean
        tokens = jnp.pad(tokens, ((0, 0), (0, n_pad - n_tokens), (0, 0)))

    kernel = functools.partial(_token_backbone_kernel, act=act,
                               n_tokens=n_tokens, tile_n=tile_n)
    out = pl.pallas_call(
        kernel,
        out_shape=jax.ShapeDtypeStruct((B, 1, E), jnp.float32),
        grid_spec=pltpu.PrefetchScalarGridSpec(
            num_scalar_prefetch=0,
            grid=(B, n_pad // tile_n),
            in_specs=[
                pl.BlockSpec((1, tile_n, K), lambda b, n: (b, n, 0)),
                pl.BlockSpec((K, E), lambda b, n: (0, 0)),
                pl.BlockSpec((1, E), lambda b, n: (0, 0)),
            ],
            out_specs=pl.BlockSpec((1, 1, E), lambda b, n: (b, 0, 0)),
            scratch_shapes=[pltpu.VMEM((1, E), jnp.float32)],
        ),
        compiler_params=pltpu.CompilerParams(
            dimension_semantics=("parallel", "arbitrary"),
            vmem_limit_bytes=32 * 1024 * 1024,
        ),
    )(tokens, w1, b1)
    return out.reshape(B, E)


# ----------------------------------------------------------------------------
# Kernel 2: ResNet-like branch — in-kernel 3x3 same-conv + ReLU + GAP
# ----------------------------------------------------------------------------

def _conv_gap_kernel(x_ref, w_ref, b_ref, edge_ref, o_ref, *, cin, w_img,
                     n_positions, chunk_p, n_chunks):
    """One batch element per grid step; chunks are processed in-kernel.

    x_ref   : (1, Cin, H*W + 2W + 2) bf16  flattened NCHW image, zero-padded
              by W+1 on each side so vertical out-of-bounds taps read zeros.
    w_ref   : (E, 9*Cin) bf16  conv weight, column = (dy*3+dx)*Cin + c
    b_ref   : (E, 1) f32,  edge_ref: (2, chunk_p) bf16 left/right edge masks
    o_ref   : (1, 1, E) f32  pooled embedding
    """
    mask_l = edge_ref[0:1, :]                               # (1, chunk_p)
    mask_r = edge_ref[1:2, :]
    ones = jnp.ones((1, chunk_p), jnp.float32)

    acc = jnp.zeros((1, w_ref.shape[0]), jnp.float32)
    for c in range(n_chunks):                               # static unroll
        p0 = c * chunk_p
        h = jnp.zeros((w_ref.shape[0], chunk_p), jnp.float32)
        for dy in range(3):
            for dx in range(3):
                off = p0 + dy * w_img + dx
                slab = x_ref[0, :, off:off + chunk_p]       # (Cin, chunk_p) bf16
                if dx == 0:
                    slab = slab * mask_l                    # zero left-edge taps
                elif dx == 2:
                    slab = slab * mask_r                    # zero right-edge taps
                tap = dy * 3 + dx
                wp = w_ref[:, tap * cin:(tap + 1) * cin]    # (E, Cin) bf16
                h = h + jnp.dot(wp, slab, preferred_element_type=jnp.float32)
        h = jnp.maximum(h + b_ref[...], 0.0)                # bias + ReLU, f32
        # pooled chunk contribution on the MXU: (1, chunk_p) . (E, chunk_p)^T
        acc = acc + jax.lax.dot_general(
            ones, h, (((1,), (1,)), ((), ())),
            preferred_element_type=jnp.float32)             # (1, E)

    o_ref[...] = (acc * (1.0 / float(n_positions)))[None]


def _conv_gap_forward(x_nchw, wt, bias):
    """x_nchw: (B, Cin, H, W) f32 -> pooled embedding (B, E) f32."""
    B, cin, H, W = x_nchw.shape
    E = wt.shape[0]
    P = H * W
    chunk_rows = _choose_chunk_rows(H, W)
    chunk_p = chunk_rows * W
    n_chunks = H // chunk_rows

    # Flatten (free metadata reshape) + zero halo pad + bf16 cast: one XLA pass
    # over the raw image, no 9x im2col expansion in HBM.
    x_flat = jnp.pad(x_nchw.reshape(B, cin, P),
                     ((0, 0), (0, 0), (W + 1, W + 1))).astype(jnp.bfloat16)
    p_pad = P + 2 * W + 2

    # Left/right image-edge masks for one chunk (chunks are row-aligned).
    col = jnp.arange(W)
    edge = jnp.stack([jnp.tile((col != 0).astype(jnp.bfloat16), chunk_rows),
                      jnp.tile((col != W - 1).astype(jnp.bfloat16), chunk_rows)],
                     axis=0)                                   # (2, chunk_p)

    kernel = functools.partial(_conv_gap_kernel, cin=cin, w_img=W,
                               n_positions=P, chunk_p=chunk_p,
                               n_chunks=n_chunks)
    out = pl.pallas_call(
        kernel,
        out_shape=jax.ShapeDtypeStruct((B, 1, E), jnp.float32),
        grid_spec=pltpu.PrefetchScalarGridSpec(
            num_scalar_prefetch=0,
            grid=(B,),
            in_specs=[
                pl.BlockSpec((1, cin, p_pad), lambda b: (b, 0, 0)),
                pl.BlockSpec((E, 9 * cin), lambda b: (0, 0)),
                pl.BlockSpec((E, 1), lambda b: (0, 0)),
                pl.BlockSpec((2, chunk_p), lambda b: (0, 0)),
            ],
            out_specs=pl.BlockSpec((1, 1, E), lambda b: (b, 0, 0)),
        ),
        compiler_params=pltpu.CompilerParams(
            dimension_semantics=("parallel",),
            vmem_limit_bytes=32 * 1024 * 1024,
        ),
    )(x_flat, wt, bias, edge)
    return out.reshape(B, E)


# ----------------------------------------------------------------------------
# Kernel 3: fused classification heads + AttentionModule
# ----------------------------------------------------------------------------

def _head_attention_kernel(p1_ref, p2_ref, w2s_ref, b2s_ref, w2r_ref, b2r_ref,
                           aw1_ref, ab1_ref, aw2_ref, ab2_ref, o_ref):
    """p1/p2: (B, E*) pooled embeddings; output (B, C_pad) = attention-mixed."""
    B = p1_ref.shape[0]
    x1 = jnp.dot(p1_ref[...], w2s_ref[...],
                 preferred_element_type=jnp.float32) + b2s_ref[...]   # (B, C)
    x2 = jnp.dot(p2_ref[...], w2r_ref[...],
                 preferred_element_type=jnp.float32) + b2r_ref[...]   # (B, C)

    # Shared attention Linear + tanh on the stacked (2B, C) operand.
    xs = jnp.concatenate([x1, x2], axis=0)                            # (2B, C)
    h = jnp.tanh(jnp.dot(xs, aw1_ref[...],
                         preferred_element_type=jnp.float32) + ab1_ref[...])
    # (., 1) scores as a VPU multiply-reduce; final bias read from SMEM.
    s = jnp.sum(h * aw2_ref[...], axis=-1, keepdims=True) + ab2_ref[0]  # (2B,1)
    s1, s2 = s[:B], s[B:]

    m = jnp.maximum(s1, s2)
    e1 = jnp.exp(s1 - m)
    e2 = jnp.exp(s2 - m)
    # approx reciprocal (EUP); weights sum to ~1 (use approx=False for parity).
    inv = pl.reciprocal(e1 + e2, approx=True)
    o_ref[...] = x1 * (e1 * inv) + x2 * (e2 * inv)


def _head_attention_forward(p1, p2, params):
    B = p1.shape[0]
    c_pad = params["swin_w2"].shape[1]
    vmem = pl.BlockSpec(memory_space=pltpu.MemorySpace.VMEM)
    smem = pl.BlockSpec(memory_space=pltpu.MemorySpace.SMEM)
    return pl.pallas_call(
        _head_attention_kernel,
        out_shape=jax.ShapeDtypeStruct((B, c_pad), jnp.float32),
        in_specs=[vmem] * 9 + [smem],
        out_specs=vmem,
    )(p1, p2,
      params["swin_w2"], params["swin_b2"],
      params["res_w2"], params["res_b2"],
      params["att_w1"], params["att_b1"],
      params["att_w2"], params["att_b2"])


# ----------------------------------------------------------------------------
# Token extraction for the swin branch (wrapper-side; fused with bf16 cast)
# ----------------------------------------------------------------------------

def _extract_patches_nchw(x, p):
    B, C, H, W = x.shape
    t = x.reshape(B, C, H // p, p, W // p, p)
    t = t.transpose(0, 2, 4, 3, 5, 1)              # (B, H/p, W/p, p, p, C)
    return t.reshape(B, (H // p) * (W // p), p * p * C)   # feat = (dy*p+dx)*C+c


# ----------------------------------------------------------------------------
# Parameters (native sizes; only the C-dim attention tensors are lane-padded)
# ----------------------------------------------------------------------------

def init_params(num_classes=1, in_ch=3, patch=4, swin_dim=32, res_dim=16):
    key = jax.random.PRNGKey(42)
    ks = jax.random.split(key, 12)
    s = 0.1

    def w(k, shape):
        return (s * jax.random.normal(k, shape)).astype(jnp.float32)

    def pad_cols(a, cols):
        return jnp.pad(a, ((0, 0), (0, cols - a.shape[1])))

    k1 = patch * patch * in_ch                     # 48
    cp = _round_up(num_classes, _C_PAD)            # zero padding preserves math

    return {
        # Swin-like branch: 4x4 patch-embed (bf16) + head
        "swin_w1": w(ks[0], (k1, swin_dim)).astype(jnp.bfloat16),
        "swin_b1": w(ks[1], (1, swin_dim)),
        "swin_w2": pad_cols(w(ks[2], (swin_dim, num_classes)), cp),
        "swin_b2": pad_cols(w(ks[3], (1, num_classes)), cp),
        # ResNet-like branch: 3x3 same-conv weight stored as (E, 9*Cin) bf16,
        # column index = (dy*3 + dx)*Cin + c
        "res_w1t": w(ks[4], (res_dim, 9 * in_ch)).astype(jnp.bfloat16),
        "res_b1": w(ks[5], (res_dim, 1)),
        "res_w2": pad_cols(w(ks[6], (res_dim, num_classes)), cp),
        "res_b2": pad_cols(w(ks[7], (1, num_classes)), cp),
        # AttentionModule(num_classes, num_classes)
        "att_w1": jnp.pad(w(ks[8], (num_classes, num_classes)),
                          ((0, cp - num_classes), (0, cp - num_classes))),
        "att_b1": pad_cols(w(ks[9], (1, num_classes)), cp),
        # second Linear as a (1, C) row (PyTorch Linear(C, 1).weight layout)
        "att_w2": pad_cols(w(ks[10], (1, num_classes)), cp),
        # scalar bias of the second Linear -> SMEM
        "att_b2": w(ks[11], (1,)),
    }


# ----------------------------------------------------------------------------
# Forward
# ----------------------------------------------------------------------------

@functools.partial(jax.jit, static_argnames=("num_classes",))
def swin_resnet_att_forward(x_nchw, params, num_classes=1):
    """x_nchw: (B, C, H, W) float32 (PyTorch convention) -> (B, num_classes)."""
    x = x_nchw.astype(jnp.float32)

    # Branch 1: Swin-like stand-in (4x4 patch embed -> GELU -> GAP).
    # (timm swin uses exact-erf GELU; tanh approximation used here.)
    patches = _extract_patches_nchw(x, 4).astype(jnp.bfloat16)     # (B, N1, 48)
    p1 = _token_backbone_forward(patches, params["swin_w1"], params["swin_b1"],
                                 act=jax.nn.gelu)                  # (B, 32)

    # Branch 2: ResNet-like stand-in (3x3 same-conv -> ReLU -> GAP), conv built
    # in-kernel from the raw NCHW image (no im2col in HBM).
    p2 = _conv_gap_forward(x, params["res_w1t"], params["res_b1"])  # (B, 16)

    # Fused heads + torch.stack + AttentionModule in one kernel.
    out = _head_attention_forward(p1, p2, params)                   # (B, C_pad)
    return out[:, :num_classes]


if __name__ == "__main__":
    key = jax.random.PRNGKey(0)
    x = jax.random.normal(key, (2, 3, 16, 16), dtype=jnp.float32)   # NCHW input
    params = init_params(num_classes=1)

    out = swin_resnet_att_forward(x, params)
    out = jax.block_until_ready(out)
    assert out.shape == (2, 1), out.shape
    assert jnp.all(jnp.isfinite(out))
    print("KERNEL_OK")
</pallas_src>

<mosaic_0001>
module attributes {stable_mosaic.version = 11 : i64} {
  func.func @_conv_gap_kernel(%arg0: i32, %arg1: memref<1x3x290xbf16, #tpu.memory_space<vmem>>, %arg2: memref<16x27xbf16, #tpu.memory_space<vmem>>, %arg3: memref<16x1xf32, #tpu.memory_space<vmem>>, %arg4: memref<2x256xbf16, #tpu.memory_space<vmem>>, %arg5: memref<1x1x16xf32, #tpu.memory_space<vmem>>) attributes {dimension_semantics = [#tpu.dimension_semantics<parallel>], iteration_bounds = array<i64: 2>, scalar_prefetch = 0 : i64, scratch_operands = 0 : i64, tpu.core_type = #tpu.core_type<tc>, window_params = [{transform_indices = @transform_0, window_bounds = array<i64: 1, 3, 290>}, {pipeline_mode = #tpu.pipeline_mode<synchronous>, transform_indices = @transform_1, window_bounds = array<i64: 16, 27>}, {pipeline_mode = #tpu.pipeline_mode<synchronous>, transform_indices = @transform_2, window_bounds = array<i64: 16, 1>}, {pipeline_mode = #tpu.pipeline_mode<synchronous>, transform_indices = @transform_3, window_bounds = array<i64: 2, 256>}, {transform_indices = @transform_4, window_bounds = array<i64: 1, 1, 16>}]} {
    %c0 = arith.constant 0 : index
    %c0_0 = arith.constant 0 : index
    %0 = vector.load %arg4[%c0, %c0_0] : memref<2x256xbf16, #tpu.memory_space<vmem>>, vector<1x256xbf16>
    %c1 = arith.constant 1 : index
    %c0_1 = arith.constant 0 : index
    %1 = vector.load %arg4[%c1, %c0_1] : memref<2x256xbf16, #tpu.memory_space<vmem>>, vector<1x256xbf16>
    %cst = arith.constant 1.000000e+00 : f32
    %2 = vector.broadcast %cst : f32 to vector<1x256xf32>
    %cst_2 = arith.constant 0.000000e+00 : f32
    %3 = vector.broadcast %cst_2 : f32 to vector<1x16xf32>
    %cst_3 = arith.constant 0.000000e+00 : f32
    %4 = vector.broadcast %cst_3 : f32 to vector<16x256xf32>
    %c0_4 = arith.constant 0 : index
    %c0_5 = arith.constant 0 : index
    %c0_6 = arith.constant 0 : index
    %5 = vector.load %arg1[%c0_4, %c0_5, %c0_6] : memref<1x3x290xbf16, #tpu.memory_space<vmem>>, vector<1x3x256xbf16>
    %6 = vector.shape_cast %5 : vector<1x3x256xbf16> to vector<3x256xbf16>
    %7 = vector.broadcast %0 : vector<1x256xbf16> to vector<3x256xbf16>
    %8 = arith.mulf %6, %7 : vector<3x256xbf16>
    %c0_7 = arith.constant 0 : index
    %c0_8 = arith.constant 0 : index
    %9 = vector.load %arg2[%c0_7, %c0_8] : memref<16x27xbf16, #tpu.memory_space<vmem>>, vector<16x3xbf16>
    %cst_9 = arith.constant dense<0.000000e+00> : vector<16x256xf32>
    %10 = tpu.matmul %9, %8, %cst_9 {dimension_numbers = #tpu.dot_dimension_numbers<[1], [0], [0], [1], [0, 0, 1, 1], [], []>} : vector<16x3xbf16>, vector<3x256xbf16>, vector<16x256xf32> -> vector<16x256xf32>
    %11 = arith.addf %4, %10 : vector<16x256xf32>
    %c0_10 = arith.constant 0 : index
    %c0_11 = arith.constant 0 : index
    %c1_12 = arith.constant 1 : index
    %12 = vector.load %arg1[%c0_10, %c0_11, %c1_12] : memref<1x3x290xbf16, #tpu.memory_space<vmem>>, vector<1x3x256xbf16>
    %13 = vector.shape_cast %12 : vector<1x3x256xbf16> to vector<3x256xbf16>
    %c0_13 = arith.constant 0 : index
    %c3 = arith.constant 3 : index
    %14 = vector.load %arg2[%c0_13, %c3] : memref<16x27xbf16, #tpu.memory_space<vmem>>, vector<16x3xbf16>
    %cst_14 = arith.constant dense<0.000000e+00> : vector<16x256xf32>
    %15 = tpu.matmul %14, %13, %cst_14 {dimension_numbers = #tpu.dot_dimension_numbers<[1], [0], [0], [1], [0, 0, 1, 1], [], []>} : vector<16x3xbf16>, vector<3x256xbf16>, vector<16x256xf32> -> vector<16x256xf32>
    %16 = arith.addf %11, %15 : vector<16x256xf32>
    %c0_15 = arith.constant 0 : index
    %c0_16 = arith.constant 0 : index
    %c2 = arith.constant 2 : index
    %17 = vector.load %arg1[%c0_15, %c0_16, %c2] : memref<1x3x290xbf16, #tpu.memory_space<vmem>>, vector<1x3x256xbf16>
    %18 = vector.shape_cast %17 : vector<1x3x256xbf16> to vector<3x256xbf16>
    %19 = vector.broadcast %1 : vector<1x256xbf16> to vector<3x256xbf16>
    %20 = arith.mulf %18, %19 : vector<3x256xbf16>
    %c0_17 = arith.constant 0 : index
    %c6 = arith.constant 6 : index
    %21 = vector.load %arg2[%c0_17, %c6] : memref<16x27xbf16, #tpu.memory_space<vmem>>, vector<16x3xbf16>
    %cst_18 = arith.constant dense<0.000000e+00> : vector<16x256xf32>
    %22 = tpu.matmul %21, %20, %cst_18 {dimension_numbers = #tpu.dot_dimension_numbers<[1], [0], [0], [1], [0, 0, 1, 1], [], []>} : vector<16x3xbf16>, vector<3x256xbf16>, vector<16x256xf32> -> vector<16x256xf32>
    %23 = arith.addf %16, %22 : vector<16x256xf32>
    %c0_19 = arith.constant 0 : index
    %c0_20 = arith.constant 0 : index
    %c16 = arith.constant 16 : index
    %24 = vector.load %arg1[%c0_19, %c0_20, %c16] : memref<1x3x290xbf16, #tpu.memory_space<vmem>>, vector<1x3x256xbf16>
    %25 = vector.shape_cast %24 : vector<1x3x256xbf16> to vector<3x256xbf16>
    %26 = vector.broadcast %0 : vector<1x256xbf16> to vector<3x256xbf16>
    %27 = arith.mulf %25, %26 : vector<3x256xbf16>
    %c0_21 = arith.constant 0 : index
    %c9 = arith.constant 9 : index
    %28 = vector.load %arg2[%c0_21, %c9] : memref<16x27xbf16, #tpu.memory_space<vmem>>, vector<16x3xbf16>
    %cst_22 = arith.constant dense<0.000000e+00> : vector<16x256xf32>
    %29 = tpu.matmul %28, %27, %cst_22 {dimension_numbers = #tpu.dot_dimension_numbers<[1], [0], [0], [1], [0, 0, 1, 1], [], []>} : vector<16x3xbf16>, vector<3x256xbf16>, vector<16x256xf32> -> vector<16x256xf32>
    %30 = arith.addf %23, %29 : vector<16x256xf32>
    %c0_23 = arith.constant 0 : index
    %c0_24 = arith.constant 0 : index
    %c17 = arith.constant 17 : index
    %31 = vector.load %arg1[%c0_23, %c0_24, %c17] : memref<1x3x290xbf16, #tpu.memory_space<vmem>>, vector<1x3x256xbf16>
    %32 = vector.shape_cast %31 : vector<1x3x256xbf16> to vector<3x256xbf16>
    %c0_25 = arith.constant 0 : index
    %c12 = arith.constant 12 : index
    %33 = vector.load %arg2[%c0_25, %c12] : memref<16x27xbf16, #tpu.memory_space<vmem>>, vector<16x3xbf16>
    %cst_26 = arith.constant dense<0.000000e+00> : vector<16x256xf32>
    %34 = tpu.matmul %33, %32, %cst_26 {dimension_numbers = #tpu.dot_dimension_numbers<[1], [0], [0], [1], [0, 0, 1, 1], [], []>} : vector<16x3xbf16>, vector<3x256xbf16>, vector<16x256xf32> -> vector<16x256xf32>
    %35 = arith.addf %30, %34 : vector<16x256xf32>
    %c0_27 = arith.constant 0 : index
    %c0_28 = arith.constant 0 : index
    %c18 = arith.constant 18 : index
    %36 = vector.load %arg1[%c0_27, %c0_28, %c18] : memref<1x3x290xbf16, #tpu.memory_space<vmem>>, vector<1x3x256xbf16>
    %37 = vector.shape_cast %36 : vector<1x3x256xbf16> to vector<3x256xbf16>
    %38 = vector.broadcast %1 : vector<1x256xbf16> to vector<3x256xbf16>
    %39 = arith.mulf %37, %38 : vector<3x256xbf16>
    %c0_29 = arith.constant 0 : index
    %c15 = arith.constant 15 : index
    %40 = vector.load %arg2[%c0_29, %c15] : memref<16x27xbf16, #tpu.memory_space<vmem>>, vector<16x3xbf16>
    %cst_30 = arith.constant dense<0.000000e+00> : vector<16x256xf32>
    %41 = tpu.matmul %40, %39, %cst_30 {dimension_numbers = #tpu.dot_dimension_numbers<[1], [0], [0], [1], [0, 0, 1, 1], [], []>} : vector<16x3xbf16>, vector<3x256xbf16>, vector<16x256xf32> -> vector<16x256xf32>
    %42 = arith.addf %35, %41 : vector<16x256xf32>
    %c0_31 = arith.constant 0 : index
    %c0_32 = arith.constant 0 : index
    %c32 = arith.constant 32 : index
    %43 = vector.load %arg1[%c0_31, %c0_32, %c32] : memref<1x3x290xbf16, #tpu.memory_space<vmem>>, vector<1x3x256xbf16>
    %44 = vector.shape_cast %43 : vector<1x3x256xbf16> to vector<3x256xbf16>
    %45 = vector.broadcast %0 : vector<1x256xbf16> to vector<3x256xbf16>
    %46 = arith.mulf %44, %45 : vector<3x256xbf16>
    %c0_33 = arith.constant 0 : index
    %c18_34 = arith.constant 18 : index
    %47 = vector.load %arg2[%c0_33, %c18_34] : memref<16x27xbf16, #tpu.memory_space<vmem>>, vector<16x3xbf16>
    %cst_35 = arith.constant dense<0.000000e+00> : vector<16x256xf32>
    %48 = tpu.matmul %47, %46, %cst_35 {dimension_numbers = #tpu.dot_dimension_numbers<[1], [0], [0], [1], [0, 0, 1, 1], [], []>} : vector<16x3xbf16>, vector<3x256xbf16>, vector<16x256xf32> -> vector<16x256xf32>
    %49 = arith.addf %42, %48 : vector<16x256xf32>
    %c0_36 = arith.constant 0 : index
    %c0_37 = arith.constant 0 : index
    %c33 = arith.constant 33 : index
    %50 = vector.load %arg1[%c0_36, %c0_37, %c33] : memref<1x3x290xbf16, #tpu.memory_space<vmem>>, vector<1x3x256xbf16>
    %51 = vector.shape_cast %50 : vector<1x3x256xbf16> to vector<3x256xbf16>
    %c0_38 = arith.constant 0 : index
    %c21 = arith.constant 21 : index
    %52 = vector.load %arg2[%c0_38, %c21] : memref<16x27xbf16, #tpu.memory_space<vmem>>, vector<16x3xbf16>
    %cst_39 = arith.constant dense<0.000000e+00> : vector<16x256xf32>
    %53 = tpu.matmul %52, %51, %cst_39 {dimension_numbers = #tpu.dot_dimension_numbers<[1], [0], [0], [1], [0, 0, 1, 1], [], []>} : vector<16x3xbf16>, vector<3x256xbf16>, vector<16x256xf32> -> vector<16x256xf32>
    %54 = arith.addf %49, %53 : vector<16x256xf32>
    %c0_40 = arith.constant 0 : index
    %c0_41 = arith.constant 0 : index
    %c34 = arith.constant 34 : index
    %55 = vector.load %arg1[%c0_40, %c0_41, %c34] : memref<1x3x290xbf16, #tpu.memory_space<vmem>>, vector<1x3x256xbf16>
    %56 = vector.shape_cast %55 : vector<1x3x256xbf16> to vector<3x256xbf16>
    %57 = vector.broadcast %1 : vector<1x256xbf16> to vector<3x256xbf16>
    %58 = arith.mulf %56, %57 : vector<3x256xbf16>
    %c0_42 = arith.constant 0 : index
    %c24 = arith.constant 24 : index
    %59 = vector.load %arg2[%c0_42, %c24] : memref<16x27xbf16, #tpu.memory_space<vmem>>, vector<16x3xbf16>
    %cst_43 = arith.constant dense<0.000000e+00> : vector<16x256xf32>
    %60 = tpu.matmul %59, %58, %cst_43 {dimension_numbers = #tpu.dot_dimension_numbers<[1], [0], [0], [1], [0, 0, 1, 1], [], []>} : vector<16x3xbf16>, vector<3x256xbf16>, vector<16x256xf32> -> vector<16x256xf32>
    %61 = arith.addf %54, %60 : vector<16x256xf32>
    %c0_44 = arith.constant 0 : index
    %c0_45 = arith.constant 0 : index
    %62 = vector.load %arg3[%c0_44, %c0_45] : memref<16x1xf32, #tpu.memory_space<vmem>>, vector<16x1xf32>
    %63 = vector.broadcast %62 : vector<16x1xf32> to vector<16x256xf32>
    %64 = arith.addf %61, %63 : vector<16x256xf32>
    %cst_46 = arith.constant 0.000000e+00 : f32
    %65 = vector.broadcast %cst_46 : f32 to vector<16x256xf32>
    %66 = arith.maximumf %64, %65 : vector<16x256xf32>
    %cst_47 = arith.constant dense<0.000000e+00> : vector<1x16xf32>
    %67 = tpu.matmul %2, %66, %cst_47 {dimension_numbers = #tpu.dot_dimension_numbers<[1], [1], [0], [0], [0, 0, 1, 0], [], []>} : vector<1x256xf32>, vector<16x256xf32>, vector<1x16xf32> -> vector<1x16xf32>
    %68 = arith.addf %3, %67 : vector<1x16xf32>
    %cst_48 = arith.constant 3.906250e-03 : f32
    %69 = vector.broadcast %cst_48 : f32 to vector<1x16xf32>
    %70 = arith.mulf %68, %69 : vector<1x16xf32>
    %71 = vector.shape_cast %70 : vector<1x16xf32> to vector<1x1x16xf32>
    %c0_49 = arith.constant 0 : index
    %c0_50 = arith.constant 0 : index
    %c0_51 = arith.constant 0 : index
    %72 = vector.load %arg5[%c0_49, %c0_50, %c0_51] : memref<1x1x16xf32, #tpu.memory_space<vmem>>, vector<1x1x16xf32>
    tpu.vector_store %arg5[%c0_49, %c0_50, %c0_51], %71 {strides = array<i32>} : memref<1x1x16xf32, #tpu.memory_space<vmem>>, vector<1x1x16xf32>,
    return
  }
  func.func @transform_0(%arg0: i32) -> (i32, i32, i32) {
    %c0_i32 = arith.constant 0 : i32
    %c0_i32_0 = arith.constant 0 : i32
    %c0_i32_1 = arith.constant 0 : i32
    return %arg0, %c0_i32, %c0_i32_0 : i32, i32, i32
  }
  func.func @transform_1(%arg0: i32) -> (i32, i32) {
    %c0_i32 = arith.constant 0 : i32
    %c0_i32_0 = arith.constant 0 : i32
    %c0_i32_1 = arith.constant 0 : i32
    return %c0_i32, %c0_i32_0 : i32, i32
  }
  func.func @transform_2(%arg0: i32) -> (i32, i32) {
    %c0_i32 = arith.constant 0 : i32
    %c0_i32_0 = arith.constant 0 : i32
    %c0_i32_1 = arith.constant 0 : i32
    return %c0_i32, %c0_i32_0 : i32, i32
  }
  func.func @transform_3(%arg0: i32) -> (i32, i32) {
    %c0_i32 = arith.constant 0 : i32
    %c0_i32_0 = arith.constant 0 : i32
    %c0_i32_1 = arith.constant 0 : i32
    return %c0_i32, %c0_i32_0 : i32, i32
  }
  func.func @transform_4(%arg0: i32) -> (i32, i32, i32) {
    %c0_i32 = arith.constant 0 : i32
    %c0_i32_0 = arith.constant 0 : i32
    %c0_i32_1 = arith.constant 0 : i32
    return %arg0, %c0_i32, %c0_i32_0 : i32, i32, i32
  }
}

module attributes {stable_mosaic.version = 11 : i64} {
  func.func @_token_backbone_kernel(%arg0: i32, %arg1: i32, %arg2: memref<1x16x48xbf16, #tpu.memory_space<vmem>>, %arg3: memref<48x32xbf16, #tpu.memory_space<vmem>>, %arg4: memref<1x32xf32, #tpu.memory_space<vmem>>, %arg5: memref<1x1x32xf32, #tpu.memory_space<vmem>>, %arg6: memref<1x32xf32, #tpu.memory_space<vmem>>) attributes {dimension_semantics = [#tpu.dimension_semantics<parallel>, #tpu.dimension_semantics<arbitrary>], iteration_bounds = array<i64: 2, 1>, scalar_prefetch = 0 : i64, scratch_operands = 1 : i64, tpu.core_type = #tpu.core_type<tc>, window_params = [{transform_indices = @transform_0, window_bounds = array<i64: 1, 16, 48>}, {pipeline_mode = #tpu.pipeline_mode<synchronous>, transform_indices = @transform_1, window_bounds = array<i64: 48, 32>}, {pipeline_mode = #tpu.pipeline_mode<synchronous>, transform_indices = @transform_2, window_bounds = array<i64: 1, 32>}, {transform_indices = @transform_3, window_bounds = array<i64: 1, 1, 32>}]} {
    %c0_i32 = arith.constant 0 : i32
    %0 = arith.cmpi eq, %arg1, %c0_i32 : i32
    %1 = arith.extui %0 : i1 to i32
    %c0_i32_0 = arith.constant 0 : i32
    %2 = arith.cmpi ne, %1, %c0_i32_0 : i32
    scf.if %2 {
      %cst_19 = arith.constant 0.000000e+00 : f32
      %38 = vector.broadcast %cst_19 : f32 to vector<1x32xf32>
      %c0_20 = arith.constant 0 : index
      %c0_21 = arith.constant 0 : index
      %39 = vector.load %arg6[%c0_20, %c0_21] : memref<1x32xf32, #tpu.memory_space<vmem>>, vector<1x32xf32>
      tpu.vector_store %arg6[%c0_20, %c0_21], %38 {strides = array<i32>} : memref<1x32xf32, #tpu.memory_space<vmem>>, vector<1x32xf32>,
    } else {
    }
    %c0 = arith.constant 0 : index
    %c0_1 = arith.constant 0 : index
    %c0_2 = arith.constant 0 : index
    %3 = vector.load %arg2[%c0, %c0_1, %c0_2] : memref<1x16x48xbf16, #tpu.memory_space<vmem>>, vector<1x16x48xbf16>
    %4 = vector.shape_cast %3 : vector<1x16x48xbf16> to vector<16x48xbf16>
    %c0_3 = arith.constant 0 : index
    %c0_4 = arith.constant 0 : index
    %5 = vector.load %arg3[%c0_3, %c0_4] : memref<48x32xbf16, #tpu.memory_space<vmem>>, vector<48x32xbf16>
    %cst = arith.constant dense<0.000000e+00> : vector<16x32xf32>
    %6 = tpu.matmul %4, %5, %cst {dimension_numbers = #tpu.dot_dimension_numbers<[1], [0], [0], [1], [0, 0, 1, 1], [], []>} : vector<16x48xbf16>, vector<48x32xbf16>, vector<16x32xf32> -> vector<16x32xf32>
    %c0_5 = arith.constant 0 : index
    %c0_6 = arith.constant 0 : index
    %7 = vector.load %arg4[%c0_5, %c0_6] : memref<1x32xf32, #tpu.memory_space<vmem>>, vector<1x32xf32>
    %8 = vector.broadcast %7 : vector<1x32xf32> to vector<16x32xf32>
    %9 = arith.addf %6, %8 : vector<16x32xf32>
    %10 = arith.mulf %9, %9 : vector<16x32xf32>
    %11 = arith.mulf %9, %10 : vector<16x32xf32>
    %cst_7 = arith.constant 4.471500e-02 : f32
    %12 = vector.broadcast %cst_7 : f32 to vector<16x32xf32>
    %13 = arith.mulf %12, %11 : vector<16x32xf32>
    %14 = arith.addf %9, %13 : vector<16x32xf32>
    %cst_8 = arith.constant 0.797884583 : f32
    %15 = vector.broadcast %cst_8 : f32 to vector<16x32xf32>
    %16 = arith.mulf %15, %14 : vector<16x32xf32>
    %17 = math.tanh %16 : vector<16x32xf32>
    %cst_9 = arith.constant 1.000000e+00 : f32
    %18 = vector.broadcast %cst_9 : f32 to vector<16x32xf32>
    %19 = arith.addf %18, %17 : vector<16x32xf32>
    %cst_10 = arith.constant 5.000000e-01 : f32
    %20 = vector.broadcast %cst_10 : f32 to vector<16x32xf32>
    %21 = arith.mulf %20, %19 : vector<16x32xf32>
    %22 = arith.mulf %9, %21 : vector<16x32xf32>
    %c16_i32 = arith.constant 16 : i32
    %23 = arith.muli %arg1, %c16_i32 : i32
    %24 = tpu.iota {dimensions = array<i32: 1>} : vector<1x16xi32>
    %25 = vector.broadcast %23 : i32 to vector<1x16xi32>
    %26 = arith.addi %25, %24 : vector<1x16xi32>
    %c16_i32_11 = arith.constant 16 : i32
    %27 = vector.broadcast %c16_i32_11 : i32 to vector<1x16xi32>
    %28 = arith.cmpi slt, %26, %27 : vector<1x16xi32>
    %29 = arith.extui %28 : vector<1x16xi1> to vector<1x16xi32>
    %30 = arith.sitofp %29 : vector<1x16xi32> to vector<1x16xf32>
    %c0_12 = arith.constant 0 : index
    %c0_13 = arith.constant 0 : index
    %31 = vector.load %arg6[%c0_12, %c0_13] : memref<1x32xf32, #tpu.memory_space<vmem>>, vector<1x32xf32>
    %cst_14 = arith.constant dense<0.000000e+00> : vector<1x32xf32>
    %32 = tpu.matmul %30, %22, %cst_14 {dimension_numbers = #tpu.dot_dimension_numbers<[1], [0], [0], [1], [0, 0, 1, 1], [], []>} : vector<1x16xf32>, vector<16x32xf32>, vector<1x32xf32> -> vector<1x32xf32>
    %33 = arith.addf %31, %32 : vector<1x32xf32>
    %c0_15 = arith.constant 0 : index
    %c0_16 = arith.constant 0 : index
    %34 = vector.load %arg6[%c0_15, %c0_16] : memref<1x32xf32, #tpu.memory_space<vmem>>, vector<1x32xf32>
    tpu.vector_store %arg6[%c0_15, %c0_16], %33 {strides = array<i32>} : memref<1x32xf32, #tpu.memory_space<vmem>>, vector<1x32xf32>,
    %c0_i32_17 = arith.constant 0 : i32
    %35 = arith.cmpi eq, %arg1, %c0_i32_17 : i32
    %36 = arith.extui %35 : i1 to i32
    %c0_i32_18 = arith.constant 0 : i32
    %37 = arith.cmpi ne, %36, %c0_i32_18 : i32
    scf.if %37 {
      %c0_19 = arith.constant 0 : index
      %c0_20 = arith.constant 0 : index
      %38 = vector.load %arg6[%c0_19, %c0_20] : memref<1x32xf32, #tpu.memory_space<vmem>>, vector<1x32xf32>
      %cst_21 = arith.constant 6.250000e-02 : f32
      %39 = vector.broadcast %cst_21 : f32 to vector<1x32xf32>
      %40 = arith.mulf %38, %39 : vector<1x32xf32>
      %41 = vector.shape_cast %40 : vector<1x32xf32> to vector<1x1x32xf32>
      %c0_22 = arith.constant 0 : index
      %c0_23 = arith.constant 0 : index
      %c0_24 = arith.constant 0 : index
      %42 = vector.load %arg5[%c0_22, %c0_23, %c0_24] : memref<1x1x32xf32, #tpu.memory_space<vmem>>, vector<1x1x32xf32>
      tpu.vector_store %arg5[%c0_22, %c0_23, %c0_24], %41 {strides = array<i32>} : memref<1x1x32xf32, #tpu.memory_space<vmem>>, vector<1x1x32xf32>,
    } else {
    }
    return
  }
  func.func @transform_0(%arg0: i32, %arg1: i32) -> (i32, i32, i32) {
    %c0_i32 = arith.constant 0 : i32
    %c0_i32_0 = arith.constant 0 : i32
    return %arg0, %arg1, %c0_i32 : i32, i32, i32
  }
  func.func @transform_1(%arg0: i32, %arg1: i32) -> (i32, i32) {
    %c0_i32 = arith.constant 0 : i32
    %c0_i32_0 = arith.constant 0 : i32
    %c0_i32_1 = arith.constant 0 : i32
    return %c0_i32, %c0_i32_0 : i32, i32
  }
  func.func @transform_2(%arg0: i32, %arg1: i32) -> (i32, i32) {
    %c0_i32 = arith.constant 0 : i32
    %c0_i32_0 = arith.constant 0 : i32
    %c0_i32_1 = arith.constant 0 : i32
    return %c0_i32, %c0_i32_0 : i32, i32
  }
  func.func @transform_3(%arg0: i32, %arg1: i32) -> (i32, i32, i32) {
    %c0_i32 = arith.constant 0 : i32
    %c0_i32_0 = arith.constant 0 : i32
    %c0_i32_1 = arith.constant 0 : i32
    return %arg0, %c0_i32, %c0_i32_0 : i32, i32, i32
  }
}

module attributes {stable_mosaic.version = 11 : i64} {
  func.func @_head_attention_kernel(%arg0: memref<2x32xf32, #tpu.memory_space<vmem>>, %arg1: memref<2x16xf32, #tpu.memory_space<vmem>>, %arg2: memref<32x128xf32, #tpu.memory_space<vmem>>, %arg3: memref<1x128xf32, #tpu.memory_space<vmem>>, %arg4: memref<16x128xf32, #tpu.memory_space<vmem>>, %arg5: memref<1x128xf32, #tpu.memory_space<vmem>>, %arg6: memref<128x128xf32, #tpu.memory_space<vmem>>, %arg7: memref<1x128xf32, #tpu.memory_space<vmem>>, %arg8: memref<1x128xf32, #tpu.memory_space<vmem>>, %arg9: memref<1xf32, #tpu.memory_space<smem>>, %arg10: memref<2x128xf32, #tpu.memory_space<vmem>>) attributes {dimension_semantics = [], scalar_prefetch = 0 : i64, scratch_operands = 0 : i64, tpu.core_type = #tpu.core_type<tc>} {
    %c0 = arith.constant 0 : index
    %c0_0 = arith.constant 0 : index
    %0 = vector.load %arg0[%c0, %c0_0] : memref<2x32xf32, #tpu.memory_space<vmem>>, vector<2x32xf32>
    %c0_1 = arith.constant 0 : index
    %c0_2 = arith.constant 0 : index
    %1 = vector.load %arg2[%c0_1, %c0_2] : memref<32x128xf32, #tpu.memory_space<vmem>>, vector<32x128xf32>
    %cst = arith.constant dense<0.000000e+00> : vector<2x128xf32>
    %2 = tpu.matmul %0, %1, %cst {dimension_numbers = #tpu.dot_dimension_numbers<[1], [0], [0], [1], [0, 0, 1, 1], [], []>} : vector<2x32xf32>, vector<32x128xf32>, vector<2x128xf32> -> vector<2x128xf32>
    %c0_3 = arith.constant 0 : index
    %c0_4 = arith.constant 0 : index
    %3 = vector.load %arg3[%c0_3, %c0_4] : memref<1x128xf32, #tpu.memory_space<vmem>>, vector<1x128xf32>
    %4 = vector.broadcast %3 : vector<1x128xf32> to vector<2x128xf32>
    %5 = arith.addf %2, %4 : vector<2x128xf32>
    %c0_5 = arith.constant 0 : index
    %c0_6 = arith.constant 0 : index
    %6 = vector.load %arg1[%c0_5, %c0_6] : memref<2x16xf32, #tpu.memory_space<vmem>>, vector<2x16xf32>
    %c0_7 = arith.constant 0 : index
    %c0_8 = arith.constant 0 : index
    %7 = vector.load %arg4[%c0_7, %c0_8] : memref<16x128xf32, #tpu.memory_space<vmem>>, vector<16x128xf32>
    %cst_9 = arith.constant dense<0.000000e+00> : vector<2x128xf32>
    %8 = tpu.matmul %6, %7, %cst_9 {dimension_numbers = #tpu.dot_dimension_numbers<[1], [0], [0], [1], [0, 0, 1, 1], [], []>} : vector<2x16xf32>, vector<16x128xf32>, vector<2x128xf32> -> vector<2x128xf32>
    %c0_10 = arith.constant 0 : index
    %c0_11 = arith.constant 0 : index
    %9 = vector.load %arg5[%c0_10, %c0_11] : memref<1x128xf32, #tpu.memory_space<vmem>>, vector<1x128xf32>
    %10 = vector.broadcast %9 : vector<1x128xf32> to vector<2x128xf32>
    %11 = arith.addf %8, %10 : vector<2x128xf32>
    %12 = tpu.concatenate %5, %11 in 0 : vector<2x128xf32>, vector<2x128xf32> -> vector<4x128xf32>
    %c0_12 = arith.constant 0 : index
    %c0_13 = arith.constant 0 : index
    %13 = vector.load %arg6[%c0_12, %c0_13] : memref<128x128xf32, #tpu.memory_space<vmem>>, vector<128x128xf32>
    %cst_14 = arith.constant dense<0.000000e+00> : vector<4x128xf32>
    %14 = tpu.matmul %12, %13, %cst_14 {dimension_numbers = #tpu.dot_dimension_numbers<[1], [0], [0], [1], [0, 0, 1, 1], [], []>} : vector<4x128xf32>, vector<128x128xf32>, vector<4x128xf32> -> vector<4x128xf32>
    %c0_15 = arith.constant 0 : index
    %c0_16 = arith.constant 0 : index
    %15 = vector.load %arg7[%c0_15, %c0_16] : memref<1x128xf32, #tpu.memory_space<vmem>>, vector<1x128xf32>
    %16 = vector.broadcast %15 : vector<1x128xf32> to vector<4x128xf32>
    %17 = arith.addf %14, %16 : vector<4x128xf32>
    %18 = math.tanh %17 : vector<4x128xf32>
    %c0_17 = arith.constant 0 : index
    %c0_18 = arith.constant 0 : index
    %19 = vector.load %arg8[%c0_17, %c0_18] : memref<1x128xf32, #tpu.memory_space<vmem>>, vector<1x128xf32>
    %20 = vector.broadcast %19 : vector<1x128xf32> to vector<4x128xf32>
    %21 = arith.mulf %18, %20 : vector<4x128xf32>
    %cst_19 = arith.constant dense<0.000000e+00> : vector<4xf32>
    %22 = vector.multi_reduction <add>, %21, %cst_19 [1] : vector<4x128xf32> to vector<4xf32>
    %23 = vector.shape_cast %22 : vector<4xf32> to vector<4x1xf32>
    %c0_20 = arith.constant 0 : index
    %24 = memref.load %arg9[%c0_20] : memref<1xf32, #tpu.memory_space<smem>>
    %25 = vector.broadcast %24 : f32 to vector<4x1xf32>
    %26 = arith.addf %23, %25 : vector<4x1xf32>
    %27 = vector.extract_strided_slice %26 {offsets = [0, 0], sizes = [2, 1], strides = [1, 1]} : vector<4x1xf32> to vector<2x1xf32>
    %28 = vector.extract_strided_slice %26 {offsets = [2, 0], sizes = [2, 1], strides = [1, 1]} : vector<4x1xf32> to vector<2x1xf32>
    %29 = arith.maximumf %27, %28 : vector<2x1xf32>
    %30 = arith.subf %27, %29 : vector<2x1xf32>
    %31 = math.exp %30 : vector<2x1xf32>
    %32 = arith.subf %28, %29 : vector<2x1xf32>
    %33 = math.exp %32 : vector<2x1xf32>
    %34 = arith.addf %31, %33 : vector<2x1xf32>
    %35 = tpu.reciprocal %34 {approx = true} : vector<2x1xf32> -> vector<2x1xf32>
    %36 = arith.mulf %31, %35 : vector<2x1xf32>
    %37 = vector.broadcast %36 : vector<2x1xf32> to vector<2x128xf32>
    %38 = arith.mulf %5, %37 : vector<2x128xf32>
    %39 = arith.mulf %33, %35 : vector<2x1xf32>
    %40 = vector.broadcast %39 : vector<2x1xf32> to vector<2x128xf32>
    %41 = arith.mulf %11, %40 : vector<2x128xf32>
    %42 = arith.addf %38, %41 : vector<2x128xf32>
    %c0_21 = arith.constant 0 : index
    %c0_22 = arith.constant 0 : index
    %43 = vector.load %arg10[%c0_21, %c0_22] : memref<2x128xf32, #tpu.memory_space<vmem>>, vector<2x128xf32>
    tpu.vector_store %arg10[%c0_21, %c0_22], %42 {strides = array<i32>} : memref<2x128xf32, #tpu.memory_space<vmem>>, vector<2x128xf32>,
    return
  }
}

</mosaic_0001>

<llo_original>
// kernel: tile.17
$region0: #{tile.17}
  #allocation0 [shape = 's32[1]{0}', space=sflag, size = 0x4, scoped, tag = 'scoped memory for tile.17']
  %s0 = inlined_call_operand.vmem [shape: bf16[16], index: 0, kind: input, shape index: {}]
  %s1 = inlined_call_operand.vmem [shape: bf16[16,16], index: 1, kind: output, shape index: {}]
  // Predicated region
  $region2: #{tile.17} parent=0 // pred_check
    _
  $region3: #{tile.17} parent=0 // pred_check_branch
    %3 = sbr.rel (0) target = $region5
  $region4: #{tile.17} parent=0 // pred_region
    _
  $region5: #{tile.17} parent=0 // pred_fallthru
    _
  %v4 = vld [vmem:[%s0] ss:$0 sm:$0xff]
  %v5 = vunpack.i.l.bf16 %v4
  %v7 = vunpack.i.h.bf16 %v4
  %v9 = vpack.c.bf16 0.0, %v5
  %10 = vst [vmem:[%s1] sm:$0xf] %v9
  %s11 = scalar_lea.vmem %s1, 4
  %v12 = vpack.c.bf16 0.0, %v5
  %13 = vst [vmem:[%s11] sm:$0xf] %v12

// kernel: tile.19
$region0: #{tile.19}
  %s0 = inlined_call_operand.vmem [shape: bf16[16,16], index: 0, kind: input, shape index: {}]
  %s1 = inlined_call_operand.vmem [shape: bf16[1,256], index: 1, kind: output, shape index: {}]
  $region1: #{tile.19} parent=0
    #allocation0 [shape = 'u8[8192]{0}', space=vmem, size = 0x2000, scoped, tag = 'scoped mem for output reshape']
    #allocation1 [shape = 'u8[8192]{0}', space=vmem, size = 0x2000, scoped, tag = 'scoped mem for input reshape']
    %s3 = smul.u32 4, 2
    %s4 = sshllo.u32 0, %s3
    %s5 = scalar_lea.vmem %s0, 4
    %s6 = sshrl.u32 %s4, 1
    %s7 = sor.u32 %s4, %s6
    %s8 = sand.u32 %s7, 85
    %s9 = sshrl.u32 %s8, 1
    %s10 = sor.u32 %s8, %s9
    %s11 = sand.u32 51, %s10
    %s12 = sshrl.u32 %s11, 2
    %s13 = sor.u32 %s11, %s12
    %s14 = sand.u32 15, %s13
    %v15 = vld [vmem:[%s5] sm:%s14]
    %v16 = vunpack.c.l.bf16 %v15
    %v17 = vunpack.c.h.bf16 %v15
    %s18 = scalar_lea.vmem [#allocation1], 8
    %19 = vst [vmem:[%s18] sm:%s4] %v16
    %s20 = sshrl.u32 %s4, 1
    %s21 = sor.u32 %s4, %s20
    %s22 = sand.u32 %s21, 85
    %s23 = sshrl.u32 %s22, 1
    %s24 = sor.u32 %s22, %s23
    %s25 = sand.u32 51, %s24
    %s26 = sshrl.u32 %s25, 2
    %s27 = sor.u32 %s25, %s26
    %s28 = sand.u32 15, %s27
    %v29 = vld [vmem:[%s0] sm:%s28]
    %v30 = vunpack.c.l.bf16 %v29
    %v31 = vunpack.c.h.bf16 %v29
    %32 = vst [vmem:[#allocation1] sm:%s4] %v30
    %s33 = smov 3
    %v34 = vld [vmem:[#allocation1] ss:$8 sm:%s33]
    %vm35 = vcmask 130048
    %36 = vst.msk [vmem:[#allocation0] ss:$8 sm:$0x3] %vm35, %v34
    %s37 = scalar_lea.vmem [#allocation1], 7
    %s38 = smov 3
    %v39 = vld [vmem:[%s37] ss:$8 sm:%s38]
    %40 = vrot.lane.b32.xlu0 %v39, 112
    %v41 = vpop.permute.xlu0 %40
    %vm42 = vcmask 1048448
    %43 = vst.msk [vmem:[#allocation0] ss:$8 sm:$0x3] %vm42, %v41
    %s44 = scalar_lea.vmem [#allocation1], 6
    %s45 = smov 3
    %v46 = vld [vmem:[%s44] ss:$8 sm:%s45]
    %47 = vrot.lane.b32.xlu0 %v46, 96
    %v48 = vpop.permute.xlu0 %47
    %vm49 = vcmask 917248
    %50 = vst.msk [vmem:[#allocation0] ss:$8 sm:$0x3] %vm49, %v48
    %s51 = scalar_lea.vmem [#allocation1], 5
    %s52 = smov 3
    %v53 = vld [vmem:[%s51] ss:$8 sm:%s52]
    %54 = vrot.lane.b32.xlu0 %v53, 80
    %v55 = vpop.permute.xlu0 %54
    %vm56 = vcmask 786048
    %57 = vst.msk [vmem:[#allocation0] ss:$8 sm:$0x3] %vm56, %v55
    %s58 = scalar_lea.vmem [#allocation1], 4
    %s59 = smov 3
    %v60 = vld [vmem:[%s58] ss:$8 sm:%s59]
    %61 = vrot.lane.b32.xlu0 %v60, 64
    %v62 = vpop.permute.xlu0 %61
    %vm63 = vcmask 654848
    %64 = vst.msk [vmem:[#allocation0] ss:$8 sm:$0x3] %vm63, %v62
    %s65 = scalar_lea.vmem [#allocation1], 3
    %s66 = smov 3
    %v67 = vld [vmem:[%s65] ss:$8 sm:%s66]
    %68 = vrot.lane.b32.xlu0 %v67, 48
    %v69 = vpop.permute.xlu0 %68
    %vm70 = vcmask 523648
    %71 = vst.msk [vmem:[#allocation0] ss:$8 sm:$0x3] %vm70, %v69
    %s72 = scalar_lea.vmem [#allocation1], 2
    %s73 = smov 3
    %v74 = vld [vmem:[%s72] ss:$8 sm:%s73]
    %75 = vrot.lane.b32.xlu0 %v74, 32
    %v76 = vpop.permute.xlu0 %75
    %vm77 = vcmask 392448
    %78 = vst.msk [vmem:[#allocation0] ss:$8 sm:$0x3] %vm77, %v76
    %s79 = scalar_lea.vmem [#allocation1], 1
    %s80 = smov 3
    %v81 = vld [vmem:[%s79] ss:$8 sm:%s80]
    %82 = vrot.lane.b32.xlu0 %v81, 16
    %v83 = vpop.permute.xlu0 %82
    %vm84 = vcmask 261248
    %85 = vst.msk [vmem:[#allocation0] ss:$8 sm:$0x3] %vm84, %v83
    %s87 = smul.u32 1, 2
    %s88 = sshllo.u32 0, %s87
    %s89 = sshrl.u32 %s87, 1
    %v90 = vld [vmem:[#allocation0] sm:%s88]
    %v91 = vpack.c.bf16 0.0, %v90
    %s92 = sshllo.u32 0, %s89
    %93 = vst [vmem:[%s1] sm:%s92] %v91
    %s94 = scalar_lea.vmem [#allocation0], 8
    %v95 = vld [vmem:[%s94] sm:%s88]
    %v96 = vpack.c.bf16 0.0, %v95
    %s97 = sshllo.u32 0, %s89
    %s98 = scalar_lea.vmem %s1, 1
    %99 = vst [vmem:[%s98] sm:%s97] %v96

// kernel: swin_resnet_att_forward.3
$region0: #{swin_resnet_att_forward.3}
  #allocation0 [shape = 'u32[]', space=smem, size = 0x4, offset = 0x4, fixed_abs, tag = 'smem constant byte address 0x4 - core index']
  #allocation1 [shape = 'u32[144,128]{1,0:T(1,128)}', space=vmem, size = 0x12000, scoped, tag = 'internal scratch']
  #allocation2 [shape = 'f32[1,32]{1,0:T(1,128)}', space=vmem, size = 0x200, scoped, tag = 'scratch operand']
  %s0 = inlined_call_operand.vmem [shape: bf16[2,16,48], index: 0, kind: input, shape index: {}]
  %s1 = inlined_call_operand.vmem [shape: bf16[48,32], index: 1, kind: input, shape index: {}]
  %s2 = inlined_call_operand.vmem [shape: f32[1,32], index: 2, kind: input, shape index: {}]
  %s3 = inlined_call_operand.vmem [shape: f32[2,1,32], index: 3, kind: output, shape index: {}]
  %s4 = sld [smem:[#allocation0]]
  $region53: #{swin_resnet_att_forward.3} parent=0
    _
  %s6 = ssub.s32 1, %s4
  %s7 = scalar_select 0, %s6, %s4
  loop: start=0, step=1, limit=4
  $region2: #{swin_resnet_att_forward.3} parent=0 // loop_pre_header
    _
  $region3: #{swin_resnet_att_forward.3} parent=0 // loop_header
    %s9 = sphi 0, %s13
    %p10 = scmp.ge.s32.totalorder %s9, 4
    %s16 = sphi 0, %s28
    %s17 = sphi 0, %s24
    %s18 = sphi 0, %s16
    %s19 = sphi 0, %s17
    %s20 = sphi 0, %s18
    %s21 = sphi 0, %s19
    %s33 = sphi 0, %s35
    %s36 = sphi 0, %s33
    %s37 = sphi 0, %s36
    %s53 = sphi 0, %s37
    %s57 = sphi 0, %s57
    %s59 = sphi 0, %s57
    %s60 = sphi 0, %s59
    %s74 = sphi 0, %s60
    %s78 = sphi 0, %s78
    %s80 = sphi 0, %s78
    %s81 = sphi 0, %s80
    %s95 = sphi 0, %s81
    %s101 = sphi 0, %s103
    %s104 = sphi 0, %s101
    %s105 = sphi 0, %s104
    %s121 = sphi 0, %s105
  $region4: #{swin_resnet_att_forward.3} parent=0 // loop_header_branch
    %12 = sbr.rel (%p10) target = $region8
  $region5: #{swin_resnet_att_forward.3} parent=0 // loop_body
    %s14 = ssub.s32 %s9, 1
    %s15 = ssub.s32 %s9, 2
    %s22 = sadd.s32 1, %s17
    %p23 = scmp.ge.s32.totalorder %s22, 1
    %s24 = scalar_select %p23, 0, %s22
    %s25 = sadd.s32 1, %s16
    %s26 = scalar_select %p23, %s25, %s16
    %p27 = scmp.ge.s32.totalorder %s26, 2
    %s28 = scalar_select %p27, 0, %s26
    %s29 = ssub.s32 %s16, %s28
    %s30 = ssub.s32 %s17, %s24
    %s31 = sor.u32 %s29, %s30
    %p32 = scmp.eq.s32.totalorder %s31, 0
    %s34 = sadd.s32 %s33, 1
    %s35 = scalar_select %p32, %s33, %s34
    %p38 = pneg %p32
    %p39 = scmp.eq.s32.totalorder %s9, 1
    %p40 = por %p38, %p39
    %p41 = scmp.ne.s32.totalorder %s33, %s36
    %p42 = scmp.eq.s32.totalorder %s9, 0
    %p43 = por %p41, %p42
    %p44 = scmp.ne.s32.totalorder %s33, %s36
    %p45 = scmp.eq.s32.totalorder %s14, 1
    %p46 = por %p44, %p45
    %p47 = scmp.ne.s32.totalorder %s36, %s37
    %p48 = scmp.eq.s32.totalorder %s14, 0
    %p49 = por %p47, %p48
    %p50 = scmp.ne.s32.totalorder %s36, %s37
    %p51 = scmp.eq.s32.totalorder %s15, 1
    %p52 = por %p50, %p51
    %p54 = scmp.ne.s32.totalorder %s37, %s53
    %p55 = scmp.eq.s32.totalorder %s15, 0
    %p56 = por %p54, %p55
    %s58 = sadd.s32 %s57, 1
    %p61 = scmp.eq.s32.totalorder %s9, 1
    %p62 = scmp.ne.s32.totalorder %s57, %s59
    %p63 = scmp.eq.s32.totalorder %s9, 0
    %p64 = por %p62, %p63
    %p65 = scmp.ne.s32.totalorder %s57, %s59
    %p66 = scmp.eq.s32.totalorder %s14, 1
    %p67 = por %p65, %p66
    %p68 = scmp.ne.s32.totalorder %s59, %s60
    %p69 = scmp.eq.s32.totalorder %s14, 0
    %p70 = por %p68, %p69
    %p71 = scmp.ne.s32.totalorder %s59, %s60
    %p72 = scmp.eq.s32.totalorder %s15, 1
    %p73 = por %p71, %p72
    %p75 = scmp.ne.s32.totalorder %s60, %s74
    %p76 = scmp.eq.s32.totalorder %s15, 0
    %p77 = por %p75, %p76
    %s79 = sadd.s32 %s78, 1
    %p82 = scmp.eq.s32.totalorder %s9, 1
    %p83 = scmp.ne.s32.totalorder %s78, %s80
    %p84 = scmp.eq.s32.totalorder %s9, 0
    %p85 = por %p83, %p84
    %p86 = scmp.ne.s32.totalorder %s78, %s80
    %p87 = scmp.eq.s32.totalorder %s14, 1
    %p88 = por %p86, %p87
    %p89 = scmp.ne.s32.totalorder %s80, %s81
    %p90 = scmp.eq.s32.totalorder %s14, 0
    %p91 = por %p89, %p90
    %p92 = scmp.ne.s32.totalorder %s80, %s81
    %p93 = scmp.eq.s32.totalorder %s15, 1
    %p94 = por %p92, %p93
    %p96 = scmp.ne.s32.totalorder %s81, %s95
    %p97 = scmp.eq.s32.totalorder %s15, 0
    %p98 = por %p96, %p97
    %s99 = ssub.s32 %s16, %s28
    %p100 = scmp.eq.s32.totalorder %s99, 0
    %s102 = sadd.s32 %s101, 1
    %s103 = scalar_select %p100, %s101, %s102
    %p106 = pneg %p100
    %p107 = scmp.eq.s32.totalorder %s9, 1
    %p108 = por %p106, %p107
    %p109 = scmp.ne.s32.totalorder %s101, %s104
    %p110 = scmp.eq.s32.totalorder %s9, 0
    %p111 = por %p109, %p110
    %p112 = scmp.ne.s32.totalorder %s101, %s104
    %p113 = scmp.eq.s32.totalorder %s14, 1
    %p114 = por %p112, %p113
    %p115 = scmp.ne.s32.totalorder %s104, %s105
    %p116 = scmp.eq.s32.totalorder %s14, 0
    %p117 = por %p115, %p116
    %p118 = scmp.ne.s32.totalorder %s104, %s105
    %p119 = scmp.eq.s32.totalorder %s15, 1
    %p120 = por %p118, %p119
    %p122 = scmp.ne.s32.totalorder %s105, %s121
    %p123 = scmp.eq.s32.totalorder %s15, 0
    %p124 = por %p122, %p123
    %p125 = scmp.le.s32.totalorder 1, %s9
    %p126 = scmp.lt.s32.totalorder %s9, 3
    %p127 = pnand %p125, %p126
    %p128 = pneg %p127
    // Predicated region
    $region9: #{swin_resnet_att_forward.3} parent=5 // pred_check
      _
    $region10: #{swin_resnet_att_forward.3} parent=5 // pred_check_branch
      %130 = sbr.rel (%p127) target = $region12
    $region11: #{swin_resnet_att_forward.3} parent=5 // pred_region
      %s131 = ssub.s32 %s9, 1
      // Predicated region
      $region13: #{swin_resnet_att_forward.3} parent=11 // pred_check
        %p132 = pneg %p70
      $region14: #{swin_resnet_att_forward.3} parent=11 // pred_check_branch
        %134 = sbr.rel (%p132) target = $region16
      $region15: #{swin_resnet_att_forward.3} parent=11 // pred_region
        _
      $region16: #{swin_resnet_att_forward.3} parent=11 // pred_fallthru
        _
      // Predicated region
      $region17: #{swin_resnet_att_forward.3} parent=11 // pred_check
        %p135 = pneg %p91
      $region18: #{swin_resnet_att_forward.3} parent=11 // pred_check_branch
        %137 = sbr.rel (%p135) target = $region20
      $region19: #{swin_resnet_att_forward.3} parent=11 // pred_region
        _
      $region20: #{swin_resnet_att_forward.3} parent=11 // pred_fallthru
        _
    $region12: #{swin_resnet_att_forward.3} parent=5 // pred_fallthru
      _
    %p138 = scmp.lt.s32.totalorder %s9, 2
    // Predicated region
    $region21: #{swin_resnet_att_forward.3} parent=5 // pred_check
      %p139 = pneg %p138
    $region22: #{swin_resnet_att_forward.3} parent=5 // pred_check_branch
      %141 = sbr.rel (%p139) target = $region24
    $region23: #{swin_resnet_att_forward.3} parent=5 // pred_region
      // Predicated region
      $region25: #{swin_resnet_att_forward.3} parent=23 // pred_check
        %p142 = pneg %p43
      $region26: #{swin_resnet_att_forward.3} parent=23 // pred_check_branch
        %144 = sbr.rel (%p142) target = $region28
      $region27: #{swin_resnet_att_forward.3} parent=23 // pred_region
        %s145 = smul.u32 2, %s17
        %p146 = scmp.lt.s32.totalorder %s16, 1
        %s147 = scalar_select %p146, %s16, 1
        %p148 = scmp.lt.s32.totalorder %s145, 1
        %s149 = scalar_select %p148, %s145, 1
        %s150 = smul.addr %s147, 2
        %s151 = sadd.s32 %s149, %s150
        %s152 = smul.addr %s151, 4
        %s153 = scalar_lea.vmem %s0, %s152
        %s154 = smul.u32 2, %s17
      $region28: #{swin_resnet_att_forward.3} parent=23 // pred_fallthru
        _
    $region24: #{swin_resnet_att_forward.3} parent=5 // pred_fallthru
      _
    %p155 = scmp.le.s32.totalorder 1, %s9
    %p156 = scmp.lt.s32.totalorder %s9, 3
    %p157 = pnand %p155, %p156
    %p158 = pneg %p157
    // Predicated region
    $region29: #{swin_resnet_att_forward.3} parent=5 // pred_check
      _
    $region30: #{swin_resnet_att_forward.3} parent=5 // pred_check_branch
      %160 = sbr.rel (%p157) target = $region32
    $region31: #{swin_resnet_att_forward.3} parent=5 // pred_region
      %s161 = ssub.s32 %s9, 1
      %s162 = smul.u32 2, %s19
      %p163 = scmp.lt.s32.totalorder %s18, 1
      %s164 = scalar_select %p163, %s18, 1
      %p165 = scmp.lt.s32.totalorder %s162, 1
      %s166 = scalar_select %p165, %s162, 1
      %s167 = smul.addr %s164, 2
      %s168 = sadd.s32 %s166, %s167
      %s169 = smul.addr %s168, 4
      %s170 = scalar_lea.vmem %s0, %s169
      %p171 = pneg %p49
      %p172 = pneg %p46
      %p173 = pneg %p70
      %p174 = pneg %p67
      %p175 = pneg %p91
      %p176 = pneg %p88
      %p177 = pneg %p117
      %p178 = pneg %p114
      %p179 = scmp.lt.s32.totalorder %s18, 1
      %s180 = scalar_select %p179, %s18, 1
      %s181 = scalar_lea.vmem %s3, %s180
      %s182 = smul.u32 2, %s19
      %p183 = scmp.lt.s32.totalorder %s18, 1
      %s184 = scalar_select %p183, %s18, 1
      %p185 = scmp.lt.s32.totalorder %s182, 1
      %s186 = scalar_select %p185, %s182, 1
      %s187 = smul.addr %s184, 2
      %s188 = sadd.s32 %s186, %s187
      %s189 = smul.addr %s188, 4
      %s190 = scalar_lea.vmem %s0, %s189
      %s191 = smul.u32 2, %s19
      %p192 = scmp.lt.s32.totalorder %s18, 1
      %s193 = scalar_select %p192, %s18, 1
      %s194 = scalar_lea.vmem %s3, %s193
      %p196 = scmp.eq.s32.totalorder %s19, 0
      // Predicated region
      $region33: #{swin_resnet_att_forward.3} parent=31 // pred_check
        %p197 = pneg %p196
      $region34: #{swin_resnet_att_forward.3} parent=31 // pred_check_branch
        %199 = sbr.rel (%p197) target = $region36
      $region35: #{swin_resnet_att_forward.3} parent=31 // pred_region
        %vm200 = vcmask 253952
        %201 = vst.msk [vmem:[#allocation2] sm:$0x1] %vm200, 0.0
      $region36: #{swin_resnet_att_forward.3} parent=31 // pred_fallthru
        _
      %v202 = vld [vmem:[%s190] sm:$0xf]
      %v203 = vld [vmem:[%s190 + $0x4] sm:$0xf]
      %v204 = vld [vmem:[%s1] sm:$0xf]
      %v205 = vld [vmem:[%s1 + $0x4] sm:$0xf]
      %v206 = vld [vmem:[%s1 + $0x8] sm:$0xf]
      %v207 = vld [vmem:[%s1 + $0xc] sm:$0xf]
      %v208 = vld [vmem:[%s1 + $0x10] sm:$0xf]
      %v209 = vld [vmem:[%s1 + $0x14] sm:$0xf]
      %v210 = vld [vmem:[%s2] sm:$0x1]
      %v212 = vlaneseq
      %v213 = vshrl.u32 %v212, 7
      %v214 = vsub.s32 0, %v213
      %v215 = vrot.slane %v210, %v214
      %v219 = vunpack.c.l.b16 %v202
      %v220 = vunpack.c.l.b16 %v203
      %v221 = vpack.c.b16 %v220, %v219
      %v228 = vunpack.c.l.b16 %v204
      %v229 = vunpack.c.l.b16 %v205
      %v230 = vunpack.c.l.b16 %v206
      %v231 = vunpack.c.l.b16 %v207
      %v232 = vunpack.c.l.b16 %v208
      %v233 = vunpack.c.l.b16 %v209
      %v234 = vpack.c.b16 %v229, %v228
      %v235 = vpack.c.b16 %v231, %v230
      %v236 = vpack.c.b16 %v233, %v232
      %vm240 = vcmask 392192
      %v242 = vsel %vm240, %v221, 0
      %244 = vmatprep.subr.bf16.mxu0 0
      %245 = vmatpush1.bf16.msra.mxu0 %v234
      %246 = vmatprep.subr.bf16.mxu0 0
      %247 = vmatpush1.bf16.msra.mxu0 %v235
      %248 = vmatprep.subr.bf16.mxu0 0
      %249 = vmatpush1.bf16.msra.mxu0 %v236
      %250 = vmatprep.subr.bf16.mxu0 0
      %251 = vmatpush1.bf16.msra.mxu0 0
      %252 = vmatprep.subr.bf16.mxu0 0
      %253 = vmatpush1.bf16.msra.mxu0 0
      %254 = vmatprep.subr.bf16.mxu0 0
      %255 = vmatpush1.bf16.msra.mxu0 0
      %256 = vmatprep.subr.bf16.mxu0 0
      %257 = vmatpush1.bf16.msra.mxu0 0
      %258 = vmatprep.subr.bf16.mxu0 0
      %259 = vmatpush1.bf16.msra.mxu0 0
      %260 = vmatprep.subr.bf16.mxu0 0
      %261 = vmatpush1.bf16.msra.mxu0 0
      %262 = vmatprep.subr.bf16.mxu0 0
      %263 = vmatpush1.bf16.msra.mxu0 0
      %264 = vmatprep.subr.bf16.mxu0 0
      %265 = vmatpush1.bf16.msra.mxu0 0
      %266 = vmatprep.subr.bf16.mxu0 0
      %267 = vmatpush1.bf16.msra.mxu0 0
      %268 = vmatprep.subr.bf16.mxu0 0
      %269 = vmatpush1.bf16.msra.mxu0 0
      %270 = vmatprep.subr.bf16.mxu0 0
      %271 = vmatpush1.bf16.msra.mxu0 0
      %272 = vmatprep.subr.bf16.mxu0 0
      %273 = vmatpush1.bf16.msra.mxu0 0
      %274 = vmatprep.subr.bf16.mxu0 0
      %275 = vmatpush1.bf16.msra.mxu0 0
      %276 = vmatprep.mubr.bf16.mxu0 0
      %277 = vmatmul.mubr.bf16.gmra.mrb[0].mxu0 %v242
      %v278 = vpop.f32.mrb[0].mxu0
      %v279 = vadd.f32 %v215, %v278
      %v280 = vpop.f32.mrb[0].mxu0
      %v281 = vpop.f32.mrb[0].mxu0
      %v282 = vadd.f32 %v215, %v281
      %v283 = vpop.f32.mrb[0].mxu0
      %284 = vdwg.mxu0
      %v285 = vmul.f32 %v279, %v279
      %v286 = vmul.f32 %v282, %v282
      %v287 = vmul.f32 %v279, %v285
      %v288 = vmul.f32 %v282, %v286
      %v289 = vmul.f32 %v287, 0.044715
      %v290 = vmul.f32 %v288, 0.044715
      %v291 = vadd.f32 %v279, %v289
      %v292 = vadd.f32 %v282, %v290
      %v293 = vmul.f32 %v291, 0.7978846
      %v294 = vmul.f32 %v292, 0.7978846
      %v295 = vtanh.pop %v293
      %v296 = vtanh.pop %v294
      %v297 = vadd.f32 %v295, 1.0
      %v298 = vadd.f32 %v296, 1.0
      %v299 = vmul.f32 %v297, 0.5
      %v300 = vmul.f32 %v298, 0.5
      %v301 = vmul.f32 %v279, %v299
      %v302 = vmul.f32 %v282, %v300
      %s303 = smul.u32 %s19, 16
      %v304 = vlaneseq
      %v305 = vand.u32 %v304, 127
      %v306 = vstv %s303
      %v307 = vadd.s32 %v306, %v305
      %vm308 = vcmp.lt.s32.totalorder %v307, 16
      %v309 = vsel %vm308, 1, 0
      %v310 = vcvt.s32.f32 %v309
      %v311 = vld [vmem:[#allocation2] sm:$0x1]
      %vm312 = vcmask 130048
      %v314 = vsel %vm312, %v310, 0
      %316 = vmatprep.subr.mxu0 0.0
      %317 = vmatpush1.msra.mxu0 %v301
      %318 = vmatprep.subr.mxu0 0.0
      %319 = vmatpush1.msra.mxu0 %v302
      %320 = vmatprep.subr.mxu0 0.0
      %321 = vmatpush1.msra.mxu0 0.0
      %322 = vmatprep.subr.mxu0 0.0
      %323 = vmatpush1.msra.mxu0 0.0
      %324 = vmatprep.subr.mxu0 0.0
      %325 = vmatpush1.msra.mxu0 0.0
      %326 = vmatprep.subr.mxu0 0.0
      %327 = vmatpush1.msra.mxu0 0.0
      %328 = vmatprep.subr.mxu0 0.0
      %329 = vmatpush1.msra.mxu0 0.0
      %330 = vmatprep.subr.mxu0 0.0
      %331 = vmatpush1.msra.mxu0 0.0
      %332 = vmatprep.subr.mxu0 0.0
      %333 = vmatpush1.msra.mxu0 0.0
      %334 = vmatprep.subr.mxu0 0.0
      %335 = vmatpush1.msra.mxu0 0.0
      %336 = vmatprep.subr.mxu0 0.0
      %337 = vmatpush1.msra.mxu0 0.0
      %338 = vmatprep.subr.mxu0 0.0
      %339 = vmatpush1.msra.mxu0 0.0
      %340 = vmatprep.subr.mxu0 0.0
      %341 = vmatpush1.msra.mxu0 0.0
      %342 = vmatprep.subr.mxu0 0.0
      %343 = vmatpush1.msra.mxu0 0.0
      %344 = vmatprep.subr.mxu0 0.0
      %345 = vmatpush1.msra.mxu0 0.0
      %346 = vmatprep.subr.mxu0 0.0
      %347 = vmatpush1.msra.mxu0 0.0
      %348 = vmatprep.subr.mxu0 0.0
      %349 = vmatpush1.msra.mxu0 0.0
      %350 = vmatprep.subr.mxu0 0.0
      %351 = vmatpush1.msra.mxu0 0.0
      %352 = vmatprep.subr.mxu0 0.0
      %353 = vmatpush1.msra.mxu0 0.0
      %354 = vmatprep.subr.mxu0 0.0
      %355 = vmatpush1.msra.mxu0 0.0
      %356 = vmatprep.subr.mxu0 0.0
      %357 = vmatpush1.msra.mxu0 0.0
      %358 = vmatprep.subr.mxu0 0.0
      %359 = vmatpush1.msra.mxu0 0.0
      %360 = vmatprep.subr.mxu0 0.0
      %361 = vmatpush1.msra.mxu0 0.0
      %362 = vmatprep.subr.mxu0 0.0
      %363 = vmatpush1.msra.mxu0 0.0
      %364 = vmatprep.subr.mxu0 0.0
      %365 = vmatpush1.msra.mxu0 0.0
      %366 = vmatprep.subr.mxu0 0.0
      %367 = vmatpush1.msra.mxu0 0.0
      %368 = vmatprep.subr.mxu0 0.0
      %369 = vmatpush1.msra.mxu0 0.0
      %370 = vmatprep.subr.mxu0 0.0
      %371 = vmatpush1.msra.mxu0 0.0
      %372 = vmatprep.subr.mxu0 0.0
      %373 = vmatpush1.msra.mxu0 0.0
      %374 = vmatprep.subr.mxu0 0.0
      %375 = vmatpush1.msra.mxu0 0.0
      %376 = vmatprep.subr.mxu0 0.0
      %377 = vmatpush1.msra.mxu0 0.0
      %378 = vmatprep.subr.mxu0 0.0
      %379 = vmatpush1.msra.mxu0 0.0
      %380 = vmatprep.mubr.f32.mxu0 0.0
      %381 = vmatmul.mubr.f32.gmra.mrb[0].mxu0 %v314
      %v382 = vpop.f32.mrb[0].mxu0
      %v383 = vadd.f32 0.0, %v382
      %v384 = vpop.f32.mrb[0].mxu0
      %385 = vdwg.mxu0
      %v386 = vadd.f32 %v311, %v383
      %vm387 = vcmask 253952
      %388 = vst.msk [vmem:[#allocation2] sm:$0x1] %vm387, %v386
      // Predicated region
      $region37: #{swin_resnet_att_forward.3} parent=31 // pred_check
        %p389 = pneg %p196
      $region38: #{swin_resnet_att_forward.3} parent=31 // pred_check_branch
        %391 = sbr.rel (%p389) target = $region40
      $region39: #{swin_resnet_att_forward.3} parent=31 // pred_region
        %v392 = vld [vmem:[#allocation2] sm:$0x1]
        %v393 = vmul.f32 %v392, 0.0625
        %394 = vst.msk [vmem:[%s194] sm:$0x1] %vm387, %v393
      $region40: #{swin_resnet_att_forward.3} parent=31 // pred_fallthru
        _
      %p395 = scmp.lt.s32.totalorder %s18, 1
      %s396 = scalar_select %p395, %s18, 1
      %s397 = scalar_lea.vmem %s3, %s396
      // Predicated region
      $region41: #{swin_resnet_att_forward.3} parent=31 // pred_check
        %p398 = pneg %p114
      $region42: #{swin_resnet_att_forward.3} parent=31 // pred_check_branch
        %400 = sbr.rel (%p398) target = $region44
      $region43: #{swin_resnet_att_forward.3} parent=31 // pred_region
        _
      $region44: #{swin_resnet_att_forward.3} parent=31 // pred_fallthru
        _
    $region32: #{swin_resnet_att_forward.3} parent=5 // pred_fallthru
      _
    %p401 = scmp.le.s32.totalorder 2, %s9
    // Predicated region
    $region45: #{swin_resnet_att_forward.3} parent=5 // pred_check
      %p402 = pneg %p401
    $region46: #{swin_resnet_att_forward.3} parent=5 // pred_check_branch
      %404 = sbr.rel (%p402) target = $region48
    $region47: #{swin_resnet_att_forward.3} parent=5 // pred_region
      %s405 = ssub.s32 %s9, 2
      // Predicated region
      $region49: #{swin_resnet_att_forward.3} parent=47 // pred_check
        %p406 = pneg %p120
      $region50: #{swin_resnet_att_forward.3} parent=47 // pred_check_branch
        %408 = sbr.rel (%p406) target = $region52
      $region51: #{swin_resnet_att_forward.3} parent=47 // pred_region
        %p409 = scmp.lt.s32.totalorder %s20, 1
        %s410 = scalar_select %p409, %s20, 1
        %s411 = scalar_lea.vmem %s3, %s410
      $region52: #{swin_resnet_att_forward.3} parent=47 // pred_fallthru
        _
    $region48: #{swin_resnet_att_forward.3} parent=5 // pred_fallthru
      _
  $region6: #{swin_resnet_att_forward.3} parent=0 // loop_footer
    %s13 = sadd.s32 1, %s9
  $region7: #{swin_resnet_att_forward.3} parent=0 // loop_footer_branch
    %8 = sbr.rel target = $region3
  $region8: #{swin_resnet_att_forward.3} parent=0 // loop_exit
    _

// kernel: swin_resnet_att_forward.4
$region0: #{swin_resnet_att_forward.4}
  #allocation0 [shape = 'u32[]', space=smem, size = 0x4, offset = 0x4, fixed_abs, tag = 'smem constant byte address 0x4 - core index']
  #allocation1 [shape = 'u32[144,128]{1,0:T(1,128)}', space=vmem, size = 0x12000, scoped, tag = 'internal scratch']
  %s0 = inlined_call_operand.vmem [shape: bf16[2,3,290], index: 0, kind: input, shape index: {}]
  %s1 = inlined_call_operand.vmem [shape: bf16[16,27], index: 1, kind: input, shape index: {}]
  %s2 = inlined_call_operand.vmem [shape: f32[16,1], index: 2, kind: input, shape index: {}]
  %s3 = inlined_call_operand.vmem [shape: bf16[2,256], index: 3, kind: input, shape index: {}]
  %s4 = inlined_call_operand.vmem [shape: f32[2,1,16], index: 4, kind: output, shape index: {}]
  %s5 = sld [smem:[#allocation0]]
  $region49: #{swin_resnet_att_forward.4} parent=0
    _
  %s7 = ssub.s32 1, %s5
  %s8 = scalar_select 0, %s7, %s5
  loop: start=0, step=1, limit=4
  $region2: #{swin_resnet_att_forward.4} parent=0 // loop_pre_header
    _
  $region3: #{swin_resnet_att_forward.4} parent=0 // loop_header
    %s10 = sphi 0, %s14
    %p11 = scmp.ge.s32.totalorder %s10, 4
    %s20 = sphi 0, %s22
    %s23 = sphi 0, %s20
    %s24 = sphi 0, %s23
    %s40 = sphi 0, %s24
    %s44 = sphi 0, %s44
    %s46 = sphi 0, %s44
    %s47 = sphi 0, %s46
    %s61 = sphi 0, %s47
    %s65 = sphi 0, %s65
    %s67 = sphi 0, %s65
    %s68 = sphi 0, %s67
    %s82 = sphi 0, %s68
    %s86 = sphi 0, %s86
    %s88 = sphi 0, %s86
    %s89 = sphi 0, %s88
    %s103 = sphi 0, %s89
    %s109 = sphi 0, %s111
    %s112 = sphi 0, %s109
    %s113 = sphi 0, %s112
    %s129 = sphi 0, %s113
  $region4: #{swin_resnet_att_forward.4} parent=0 // loop_header_branch
    %13 = sbr.rel (%p11) target = $region8
  $region5: #{swin_resnet_att_forward.4} parent=0 // loop_body
    %s15 = ssub.s32 %s10, 1
    %s16 = ssub.s32 %s10, 2
    %s17 = sadd.s32 %s10, 1
    %s18 = ssub.s32 %s10, %s17
    %p19 = scmp.eq.s32.totalorder %s18, 0
    %s21 = sadd.s32 %s20, 1
    %s22 = scalar_select %p19, %s20, %s21
    %p25 = pneg %p19
    %p26 = scmp.eq.s32.totalorder %s10, 1
    %p27 = por %p25, %p26
    %p28 = scmp.ne.s32.totalorder %s20, %s23
    %p29 = scmp.eq.s32.totalorder %s10, 0
    %p30 = por %p28, %p29
    %p31 = scmp.ne.s32.totalorder %s20, %s23
    %p32 = scmp.eq.s32.totalorder %s15, 1
    %p33 = por %p31, %p32
    %p34 = scmp.ne.s32.totalorder %s23, %s24
    %p35 = scmp.eq.s32.totalorder %s15, 0
    %p36 = por %p34, %p35
    %p37 = scmp.ne.s32.totalorder %s23, %s24
    %p38 = scmp.eq.s32.totalorder %s16, 1
    %p39 = por %p37, %p38
    %p41 = scmp.ne.s32.totalorder %s24, %s40
    %p42 = scmp.eq.s32.totalorder %s16, 0
    %p43 = por %p41, %p42
    %s45 = sadd.s32 %s44, 1
    %p48 = scmp.eq.s32.totalorder %s10, 1
    %p49 = scmp.ne.s32.totalorder %s44, %s46
    %p50 = scmp.eq.s32.totalorder %s10, 0
    %p51 = por %p49, %p50
    %p52 = scmp.ne.s32.totalorder %s44, %s46
    %p53 = scmp.eq.s32.totalorder %s15, 1
    %p54 = por %p52, %p53
    %p55 = scmp.ne.s32.totalorder %s46, %s47
    %p56 = scmp.eq.s32.totalorder %s15, 0
    %p57 = por %p55, %p56
    %p58 = scmp.ne.s32.totalorder %s46, %s47
    %p59 = scmp.eq.s32.totalorder %s16, 1
    %p60 = por %p58, %p59
    %p62 = scmp.ne.s32.totalorder %s47, %s61
    %p63 = scmp.eq.s32.totalorder %s16, 0
    %p64 = por %p62, %p63
    %s66 = sadd.s32 %s65, 1
    %p69 = scmp.eq.s32.totalorder %s10, 1
    %p70 = scmp.ne.s32.totalorder %s65, %s67
    %p71 = scmp.eq.s32.totalorder %s10, 0
    %p72 = por %p70, %p71
    %p73 = scmp.ne.s32.totalorder %s65, %s67
    %p74 = scmp.eq.s32.totalorder %s15, 1
    %p75 = por %p73, %p74
    %p76 = scmp.ne.s32.totalorder %s67, %s68
    %p77 = scmp.eq.s32.totalorder %s15, 0
    %p78 = por %p76, %p77
    %p79 = scmp.ne.s32.totalorder %s67, %s68
    %p80 = scmp.eq.s32.totalorder %s16, 1
    %p81 = por %p79, %p80
    %p83 = scmp.ne.s32.totalorder %s68, %s82
    %p84 = scmp.eq.s32.totalorder %s16, 0
    %p85 = por %p83, %p84
    %s87 = sadd.s32 %s86, 1
    %p90 = scmp.eq.s32.totalorder %s10, 1
    %p91 = scmp.ne.s32.totalorder %s86, %s88
    %p92 = scmp.eq.s32.totalorder %s10, 0
    %p93 = por %p91, %p92
    %p94 = scmp.ne.s32.totalorder %s86, %s88
    %p95 = scmp.eq.s32.totalorder %s15, 1
    %p96 = por %p94, %p95
    %p97 = scmp.ne.s32.totalorder %s88, %s89
    %p98 = scmp.eq.s32.totalorder %s15, 0
    %p99 = por %p97, %p98
    %p100 = scmp.ne.s32.totalorder %s88, %s89
    %p101 = scmp.eq.s32.totalorder %s16, 1
    %p102 = por %p100, %p101
    %p104 = scmp.ne.s32.totalorder %s89, %s103
    %p105 = scmp.eq.s32.totalorder %s16, 0
    %p106 = por %p104, %p105
    %s107 = ssub.s32 %s10, %s17
    %p108 = scmp.eq.s32.totalorder %s107, 0
    %s110 = sadd.s32 %s109, 1
    %s111 = scalar_select %p108, %s109, %s110
    %p114 = pneg %p108
    %p115 = scmp.eq.s32.totalorder %s10, 1
    %p116 = por %p114, %p115
    %p117 = scmp.ne.s32.totalorder %s109, %s112
    %p118 = scmp.eq.s32.totalorder %s10, 0
    %p119 = por %p117, %p118
    %p120 = scmp.ne.s32.totalorder %s109, %s112
    %p121 = scmp.eq.s32.totalorder %s15, 1
    %p122 = por %p120, %p121
    %p123 = scmp.ne.s32.totalorder %s112, %s113
    %p124 = scmp.eq.s32.totalorder %s15, 0
    %p125 = por %p123, %p124
    %p126 = scmp.ne.s32.totalorder %s112, %s113
    %p127 = scmp.eq.s32.totalorder %s16, 1
    %p128 = por %p126, %p127
    %p130 = scmp.ne.s32.totalorder %s113, %s129
    %p131 = scmp.eq.s32.totalorder %s16, 0
    %p132 = por %p130, %p131
    %p133 = scmp.le.s32.totalorder 1, %s10
    %p134 = scmp.lt.s32.totalorder %s10, 3
    %p135 = pnand %p133, %p134
    %p136 = pneg %p135
    // Predicated region
    $region9: #{swin_resnet_att_forward.4} parent=5 // pred_check
      _
    $region10: #{swin_resnet_att_forward.4} parent=5 // pred_check_branch
      %138 = sbr.rel (%p135) target = $region12
    $region11: #{swin_resnet_att_forward.4} parent=5 // pred_region
      %s139 = ssub.s32 %s10, 1
      // Predicated region
      $region13: #{swin_resnet_att_forward.4} parent=11 // pred_check
        %p140 = pneg %p57
      $region14: #{swin_resnet_att_forward.4} parent=11 // pred_check_branch
        %142 = sbr.rel (%p140) target = $region16
      $region15: #{swin_resnet_att_forward.4} parent=11 // pred_region
        _
      $region16: #{swin_resnet_att_forward.4} parent=11 // pred_fallthru
        _
      // Predicated region
      $region17: #{swin_resnet_att_forward.4} parent=11 // pred_check
        %p143 = pneg %p78
      $region18: #{swin_resnet_att_forward.4} parent=11 // pred_check_branch
        %145 = sbr.rel (%p143) target = $region20
      $region19: #{swin_resnet_att_forward.4} parent=11 // pred_region
        _
      $region20: #{swin_resnet_att_forward.4} parent=11 // pred_fallthru
        _
      // Predicated region
      $region21: #{swin_resnet_att_forward.4} parent=11 // pred_check
        %p146 = pneg %p99
      $region22: #{swin_resnet_att_forward.4} parent=11 // pred_check_branch
        %148 = sbr.rel (%p146) target = $region24
      $region23: #{swin_resnet_att_forward.4} parent=11 // pred_region
        _
      $region24: #{swin_resnet_att_forward.4} parent=11 // pred_fallthru
        _
    $region12: #{swin_resnet_att_forward.4} parent=5 // pred_fallthru
      _
    %p149 = scmp.lt.s32.totalorder %s10, 2
    // Predicated region
    $region25: #{swin_resnet_att_forward.4} parent=5 // pred_check
      %p150 = pneg %p149
    $region26: #{swin_resnet_att_forward.4} parent=5 // pred_check_branch
      %152 = sbr.rel (%p150) target = $region28
    $region27: #{swin_resnet_att_forward.4} parent=5 // pred_region
      // Predicated region
      $region29: #{swin_resnet_att_forward.4} parent=27 // pred_check
        %p153 = pneg %p30
      $region30: #{swin_resnet_att_forward.4} parent=27 // pred_check_branch
        %155 = sbr.rel (%p153) target = $region32
      $region31: #{swin_resnet_att_forward.4} parent=27 // pred_region
        %p156 = scmp.lt.s32.totalorder %s10, 1
        %s157 = scalar_select %p156, %s10, 1
        %s158 = smul.addr %s157, 3
        %s159 = smul.addr %s158, 2
        %s160 = scalar_lea.vmem %s0, %s159
      $region32: #{swin_resnet_att_forward.4} parent=27 // pred_fallthru
        _
    $region28: #{swin_resnet_att_forward.4} parent=5 // pred_fallthru
      _
    %p161 = scmp.le.s32.totalorder 1, %s10
    %p162 = scmp.lt.s32.totalorder %s10, 3
    %p163 = pnand %p161, %p162
    %p164 = pneg %p163
    // Predicated region
    $region33: #{swin_resnet_att_forward.4} parent=5 // pred_check
      _
    $region34: #{swin_resnet_att_forward.4} parent=5 // pred_check_branch
      %166 = sbr.rel (%p163) target = $region36
    $region35: #{swin_resnet_att_forward.4} parent=5 // pred_region
      %s167 = ssub.s32 %s10, 1
      %p168 = scmp.lt.s32.totalorder %s15, 1
      %s169 = scalar_select %p168, %s15, 1
      %s170 = smul.addr %s169, 3
      %s171 = smul.addr %s170, 2
      %s172 = scalar_lea.vmem %s0, %s171
      %p173 = pneg %p36
      %p174 = pneg %p33
      %p175 = pneg %p57
      %p176 = pneg %p54
      %p177 = pneg %p78
      %p178 = pneg %p75
      %p179 = pneg %p99
      %p180 = pneg %p96
      %p181 = pneg %p125
      %p182 = pneg %p122
      %p183 = scmp.lt.s32.totalorder %s15, 1
      %s184 = scalar_select %p183, %s15, 1
      %s185 = scalar_lea.vmem %s4, %s184
      %p186 = scmp.lt.s32.totalorder %s15, 1
      %s187 = scalar_select %p186, %s15, 1
      %s188 = smul.addr %s187, 3
      %s189 = smul.addr %s188, 2
      %s190 = scalar_lea.vmem %s0, %s189
      %p191 = scmp.lt.s32.totalorder %s15, 1
      %s192 = scalar_select %p191, %s15, 1
      %s193 = scalar_lea.vmem %s4, %s192
      %v195 = vld [vmem:[%s3] sm:$0x3]
      %v196 = vld [vmem:[%s190] sm:$0xf]
      %v199 = vunpack.c.l.s4 1966171168
      %v200 = vunpack.c.0.s8 %v199
      %v201 = vlaneseq
      %v202 = vshrl.u32 %v201, 7
      %v203 = vsub.s32 %v200, %v202
      %v204 = vrot.slane %v195, %v203
      %v205 = vcombine.high %v204, %v204
      %v207 = vunpack.c.l.s4 1966171168
      %v208 = vunpack.c.0.s8 %v207
      %v209 = vlaneseq
      %v210 = vshrl.u32 %v209, 7
      %v211 = vsub.s32 %v208, %v210
      %v212 = vrot.slane %v204, %v211
      %v214 = vunpack.c.l.s4 1966171168
      %v215 = vunpack.c.0.s8 %v214
      %v216 = vlaneseq
      %v217 = vshrl.u32 %v216, 7
      %v218 = vsub.s32 %v215, %v217
      %v219 = vrot.slane %v205, %v218
      %v221 = vpack.i.b16 %v212, %v212
      %v223 = vlaneseq
      %v224 = vshrl.u32 %v223, 7
      %v225 = vsub.s32 0, %v224
      %v226 = vrot.slane %v221, %v225
      %v228 = vpack.i.b16 %v219, %v219
      %v230 = vlaneseq
      %v231 = vshrl.u32 %v230, 7
      %v232 = vsub.s32 0, %v231
      %v233 = vrot.slane %v228, %v232
      %v236 = vcombine.low %v226, %v233
      %v238 = vunpack.c.l.s4 1983009808
      %v239 = vunpack.c.0.s8 %v238
      %v240 = vlaneseq
      %v241 = vshrl.u32 %v240, 7
      %v242 = vsub.s32 %v239, %v241
      %v243 = vrot.slane %v236, %v242
      %v245 = vmul.bf16 %v196, %v243
      %v246 = vld [vmem:[%s1] sm:$0xf]
      %v247 = vld [vmem:[%s1 + $0x4] sm:$0xf]
      %v248 = vld [vmem:[%s190] sm:$0x3f]
      %v251 = vunpack.c.l.b16 %v246
      %v252 = vunpack.c.l.b16 %v247
      %v253 = vpack.c.b16 %v252, %v251
      %254 = vrot.lane.b32.xlu0 %v253, 125
      %v255 = vpop.permute.xlu0 %254
      %v257 = vcombine.high %v248, %v248
      %v259 = vunpack.c.l.s4 1983009808
      %v260 = vunpack.c.0.s8 %v259
      %v261 = vlaneseq
      %v262 = vshrl.u32 %v261, 7
      %v263 = vsub.s32 %v260, %v262
      %v264 = vrot.slane %v248, %v263
      %v266 = vunpack.c.l.s4 1983009808
      %v267 = vunpack.c.0.s8 %v266
      %v268 = vlaneseq
      %v269 = vshrl.u32 %v268, 7
      %v270 = vsub.s32 %v267, %v269
      %v271 = vrot.slane %v257, %v270
      %v272 = vcombine.high %v264, %v264
      %273 = vrot.lane.b32.xlu0 %v264, 127
      %v274 = vpop.permute.xlu0 %273
      %275 = vrot.lane.b32.xlu0 %v272, 127
      %v276 = vpop.permute.xlu0 %275
      %277 = vrot.lane.b32.xlu0 %v271, 127
      %v278 = vpop.permute.xlu0 %277
      %vm279 = vcmask 1039360
      %v280 = vsel %vm279, %v274, %v276
      %v281 = vsel %vm279, %v276, %v278
      %vm282 = vcmask 23552
      %v284 = vsel %vm282, %v255, 0
      %vm286 = vcmask 1040384
      %vm287 = vcmask 1041408
      %v288 = vsel %vm286, 4294967295, 65535
      %v289 = vsel %vm287, %v288, 0
      %v291 = vand.u32 %v280, %v289
      %v294 = vand.u32 %v281, %v289
      %296 = vmatprep.subr.bf16.mxu0 %v294
      %297 = vmatpush1.bf16.msra.mxu0 %v291
      %298 = vmatprep.subr.bf16.mxu0 0
      %299 = vmatpush1.bf16.msra.mxu0 0
      %300 = vmatprep.subr.bf16.mxu0 0
      %301 = vmatpush1.bf16.msra.mxu0 0
      %302 = vmatprep.subr.bf16.mxu0 0
      %303 = vmatpush1.bf16.msra.mxu0 0
      %304 = vmatprep.subr.bf16.mxu0 0
      %305 = vmatpush1.bf16.msra.mxu0 0
      %306 = vmatprep.subr.bf16.mxu0 0
      %307 = vmatpush1.bf16.msra.mxu0 0
      %308 = vmatprep.subr.bf16.mxu0 0
      %309 = vmatpush1.bf16.msra.mxu0 0
      %310 = vmatprep.subr.bf16.mxu0 0
      %311 = vmatpush1.bf16.msra.mxu0 0
      %312 = vmatprep.subr.bf16.mxu0 0
      %313 = vmatpush1.bf16.msra.mxu0 0
      %314 = vmatprep.subr.bf16.mxu0 0
      %315 = vmatpush1.bf16.msra.mxu0 0
      %316 = vmatprep.subr.bf16.mxu0 0
      %317 = vmatpush1.bf16.msra.mxu0 0
      %318 = vmatprep.subr.bf16.mxu0 0
      %319 = vmatpush1.bf16.msra.mxu0 0
      %320 = vmatprep.subr.bf16.mxu0 0
      %321 = vmatpush1.bf16.msra.mxu0 0
      %322 = vmatprep.subr.bf16.mxu0 0
      %323 = vmatpush1.bf16.msra.mxu0 0
      %324 = vmatprep.subr.bf16.mxu0 0
      %325 = vmatpush1.bf16.msra.mxu0 0
      %326 = vmatprep.subr.bf16.mxu0 0
      %327 = vmatpush1.bf16.msra.mxu0 0
      %328 = vmatprep.mubr.bf16.mxu0 0
      %329 = vmatmul.mubr.bf16.gmra.mrb[0].mxu0 %v284
      %v330 = vpop.f32.mrb[0].mxu0
      %v331 = vadd.f32 0.0, %v330
      %v332 = vpop.f32.mrb[0].mxu0
      %v333 = vadd.f32 0.0, %v332
      %v334 = vpop.f32.mrb[0].mxu0
      %v335 = vadd.f32 0.0, %v334
      %v336 = vpop.f32.mrb[0].mxu0
      %v337 = vadd.f32 0.0, %v336
      %338 = vdwg.mxu0
      %v341 = vunpack.c.l.s4 1983009808
      %v342 = vunpack.c.0.s8 %v341
      %v343 = vlaneseq
      %v344 = vshrl.u32 %v343, 7
      %v345 = vsub.s32 %v342, %v344
      %v346 = vrot.slane %v245, %v345
      %v347 = vcombine.high %v346, %v346
      %v349 = vsel %vm282, %v253, 0
      %v352 = vand.u32 %v346, %v289
      %v355 = vand.u32 %v347, %v289
      %357 = vmatprep.subr.bf16.mxu0 %v355
      %358 = vmatpush1.bf16.msra.mxu0 %v352
      %359 = vmatprep.subr.bf16.mxu0 0
      %360 = vmatpush1.bf16.msra.mxu0 0
      %361 = vmatprep.subr.bf16.mxu0 0
      %362 = vmatpush1.bf16.msra.mxu0 0
      %363 = vmatprep.subr.bf16.mxu0 0
      %364 = vmatpush1.bf16.msra.mxu0 0
      %365 = vmatprep.subr.bf16.mxu0 0
      %366 = vmatpush1.bf16.msra.mxu0 0
      %367 = vmatprep.subr.bf16.mxu0 0
      %368 = vmatpush1.bf16.msra.mxu0 0
      %369 = vmatprep.subr.bf16.mxu0 0
      %370 = vmatpush1.bf16.msra.mxu0 0
      %371 = vmatprep.subr.bf16.mxu0 0
      %372 = vmatpush1.bf16.msra.mxu0 0
      %373 = vmatprep.subr.bf16.mxu0 0
      %374 = vmatpush1.bf16.msra.mxu0 0
      %375 = vmatprep.subr.bf16.mxu0 0
      %376 = vmatpush1.bf16.msra.mxu0 0
      %377 = vmatprep.subr.bf16.mxu0 0
      %378 = vmatpush1.bf16.msra.mxu0 0
      %379 = vmatprep.subr.bf16.mxu0 0
      %380 = vmatpush1.bf16.msra.mxu0 0
      %381 = vmatprep.subr.bf16.mxu0 0
      %382 = vmatpush1.bf16.msra.mxu0 0
      %383 = vmatprep.subr.bf16.mxu0 0
      %384 = vmatpush1.bf16.msra.mxu0 0
      %385 = vmatprep.subr.bf16.mxu0 0
      %386 = vmatpush1.bf16.msra.mxu0 0
      %387 = vmatprep.subr.bf16.mxu0 0
      %388 = vmatpush1.bf16.msra.mxu0 0
      %389 = vmatprep.mubr.bf16.mxu0 0
      %390 = vmatmul.mubr.bf16.gmra.mrb[0].mxu0 %v349
      %v391 = vpop.f32.mrb[0].mxu0
      %v392 = vadd.f32 %v331, %v391
      %v393 = vpop.f32.mrb[0].mxu0
      %v394 = vadd.f32 %v333, %v393
      %v395 = vpop.f32.mrb[0].mxu0
      %v396 = vadd.f32 %v335, %v395
      %v397 = vpop.f32.mrb[0].mxu0
      %v398 = vadd.f32 %v337, %v397
      %399 = vdwg.mxu0
      %v400 = vld [vmem:[%s190] sm:$0x3f]
      %v401 = vshrl.u32 %v212, 16
      %v402 = vpack.i.b16 %v401, %v401
      %v404 = vlaneseq
      %v405 = vshrl.u32 %v404, 7
      %v406 = vsub.s32 0, %v405
      %v407 = vrot.slane %v402, %v406
      %v408 = vshrl.u32 %v219, 16
      %v409 = vpack.i.b16 %v408, %v408
      %v411 = vlaneseq
      %v412 = vshrl.u32 %v411, 7
      %v413 = vsub.s32 0, %v412
      %v414 = vrot.slane %v409, %v413
      %v417 = vcombine.low %v407, %v414
      %v419 = vunpack.c.l.s4 1983009808
      %v420 = vunpack.c.0.s8 %v419
      %v421 = vlaneseq
      %v422 = vshrl.u32 %v421, 7
      %v423 = vsub.s32 %v420, %v422
      %v424 = vrot.slane %v417, %v423
      %425 = vrot.lane.b32.xlu0 %v424, 2
      %v426 = vpop.permute.xlu0 %425
      %v427 = vrot.slane %v426, 6
      %vm428 = vcmask 15360
      %v429 = vsel %vm428, %v427, %v426
      %v431 = vmul.bf16 %v400, %v429
      %v432 = vld [vmem:[%s1] sm:$0xf]
      %v433 = vld [vmem:[%s1 + $0x4] sm:$0xf]
      %v436 = vunpack.c.l.b16 %v432
      %v437 = vunpack.c.l.b16 %v433
      %v438 = vpack.c.b16 %v437, %v436
      %439 = vrot.lane.b32.xlu0 %v438, 122
      %v440 = vpop.permute.xlu0 %439
      %v442 = vcombine.high %v431, %v431
      %v444 = vunpack.c.l.s4 1983009808
      %v445 = vunpack.c.0.s8 %v444
      %v446 = vlaneseq
      %v447 = vshrl.u32 %v446, 7
      %v448 = vsub.s32 %v445, %v447
      %v449 = vrot.slane %v431, %v448
      %v451 = vunpack.c.l.s4 1983009808
      %v452 = vunpack.c.0.s8 %v451
      %v453 = vlaneseq
      %v454 = vshrl.u32 %v453, 7
      %v455 = vsub.s32 %v452, %v454
      %v456 = vrot.slane %v442, %v455
      %v457 = vcombine.high %v449, %v449
      %458 = vrot.lane.b32.xlu0 %v449, 126
      %v459 = vpop.permute.xlu0 %458
      %460 = vrot.lane.b32.xlu0 %v457, 126
      %v461 = vpop.permute.xlu0 %460
      %462 = vrot.lane.b32.xlu0 %v456, 126
      %v463 = vpop.permute.xlu0 %462
      %vm464 = vcmask 1031168
      %v465 = vsel %vm464, %v459, %v461
      %v466 = vsel %vm464, %v461, %v463
      %v468 = vsel %vm282, %v440, 0
      %v471 = vand.u32 %v465, %v289
      %v474 = vand.u32 %v466, %v289
      %476 = vmatprep.subr.bf16.mxu0 %v474
      %477 = vmatpush1.bf16.msra.mxu0 %v471
      %478 = vmatprep.subr.bf16.mxu0 0
      %479 = vmatpush1.bf16.msra.mxu0 0
      %480 = vmatprep.subr.bf16.mxu0 0
      %481 = vmatpush1.bf16.msra.mxu0 0
      %482 = vmatprep.subr.bf16.mxu0 0
      %483 = vmatpush1.bf16.msra.mxu0 0
      %484 = vmatprep.subr.bf16.mxu0 0
      %485 = vmatpush1.bf16.msra.mxu0 0
      %486 = vmatprep.subr.bf16.mxu0 0
      %487 = vmatpush1.bf16.msra.mxu0 0
      %488 = vmatprep.subr.bf16.mxu0 0
      %489 = vmatpush1.bf16.msra.mxu0 0
      %490 = vmatprep.subr.bf16.mxu0 0
      %491 = vmatpush1.bf16.msra.mxu0 0
      %492 = vmatprep.subr.bf16.mxu0 0
      %493 = vmatpush1.bf16.msra.mxu0 0
      %494 = vmatprep.subr.bf16.mxu0 0
      %495 = vmatpush1.bf16.msra.mxu0 0
      %496 = vmatprep.subr.bf16.mxu0 0
      %497 = vmatpush1.bf16.msra.mxu0 0
      %498 = vmatprep.subr.bf16.mxu0 0
      %499 = vmatpush1.bf16.msra.mxu0 0
      %500 = vmatprep.subr.bf16.mxu0 0
      %501 = vmatpush1.bf16.msra.mxu0 0
      %502 = vmatprep.subr.bf16.mxu0 0
      %503 = vmatpush1.bf16.msra.mxu0 0
      %504 = vmatprep.subr.bf16.mxu0 0
      %505 = vmatpush1.bf16.msra.mxu0 0
      %506 = vmatprep.subr.bf16.mxu0 0
      %507 = vmatpush1.bf16.msra.mxu0 0
      %508 = vmatprep.mubr.bf16.mxu0 0
      %509 = vmatmul.mubr.bf16.gmra.mrb[0].mxu0 %v468
      %v510 = vpop.f32.mrb[0].mxu0
      %v511 = vadd.f32 0.0, %v510
      %v512 = vpop.f32.mrb[0].mxu0
      %v513 = vadd.f32 0.0, %v512
      %v514 = vpop.f32.mrb[0].mxu0
      %v515 = vadd.f32 0.0, %v514
      %v516 = vpop.f32.mrb[0].mxu0
      %v517 = vadd.f32 0.0, %v516
      %518 = vdwg.mxu0
      %v519 = vadd.f32 %v392, %v511
      %v520 = vadd.f32 %v394, %v513
      %v521 = vadd.f32 %v396, %v515
      %v522 = vadd.f32 %v398, %v517
      %v523 = vld [vmem:[%s190] sm:$0x3f]
      %524 = vrot.lane.b32.xlu0 %v243, 16
      %v525 = vpop.permute.xlu0 %524
      %v526 = vrot.slane %v525, 6
      %vm527 = vcmask 130048
      %v528 = vsel %vm527, %v526, %v525
      %v530 = vmul.bf16 %v523, %v528
      %v531 = vld [vmem:[%s1] sm:$0xf]
      %v532 = vld [vmem:[%s1 + $0x4] sm:$0xf]
      %v535 = vunpack.c.l.b16 %v531
      %v536 = vunpack.c.l.b16 %v532
      %v537 = vpack.c.b16 %v536, %v535
      %538 = vrot.lane.b32.xlu0 %v537, 119
      %v539 = vpop.permute.xlu0 %538
      %v541 = vcombine.high %v530, %v530
      %v543 = vunpack.c.l.s4 1983009808
      %v544 = vunpack.c.0.s8 %v543
      %v545 = vlaneseq
      %v546 = vshrl.u32 %v545, 7
      %v547 = vsub.s32 %v544, %v546
      %v548 = vrot.slane %v530, %v547
      %v550 = vunpack.c.l.s4 1983009808
      %v551 = vunpack.c.0.s8 %v550
      %v552 = vlaneseq
      %v553 = vshrl.u32 %v552, 7
      %v554 = vsub.s32 %v551, %v553
      %v555 = vrot.slane %v541, %v554
      %v556 = vcombine.high %v548, %v548
      %557 = vrot.lane.b32.xlu0 %v548, 112
      %v558 = vpop.permute.xlu0 %557
      %559 = vrot.lane.b32.xlu0 %v556, 112
      %v560 = vpop.permute.xlu0 %559
      %561 = vrot.lane.b32.xlu0 %v555, 112
      %v562 = vpop.permute.xlu0 %561
      %vm563 = vcmask 916480
      %v564 = vsel %vm563, %v558, %v560
      %v565 = vsel %vm563, %v560, %v562
      %v567 = vsel %vm282, %v539, 0
      %v570 = vand.u32 %v564, %v289
      %v573 = vand.u32 %v565, %v289
      %575 = vmatprep.subr.bf16.mxu0 %v573
      %576 = vmatpush1.bf16.msra.mxu0 %v570
      %577 = vmatprep.subr.bf16.mxu0 0
      %578 = vmatpush1.bf16.msra.mxu0 0
      %579 = vmatprep.subr.bf16.mxu0 0
      %580 = vmatpush1.bf16.msra.mxu0 0
      %581 = vmatprep.subr.bf16.mxu0 0
      %582 = vmatpush1.bf16.msra.mxu0 0
      %583 = vmatprep.subr.bf16.mxu0 0
      %584 = vmatpush1.bf16.msra.mxu0 0
      %585 = vmatprep.subr.bf16.mxu0 0
      %586 = vmatpush1.bf16.msra.mxu0 0
      %587 = vmatprep.subr.bf16.mxu0 0
      %588 = vmatpush1.bf16.msra.mxu0 0
      %589 = vmatprep.subr.bf16.mxu0 0
      %590 = vmatpush1.bf16.msra.mxu0 0
      %591 = vmatprep.subr.bf16.mxu0 0
      %592 = vmatpush1.bf16.msra.mxu0 0
      %593 = vmatprep.subr.bf16.mxu0 0
      %594 = vmatpush1.bf16.msra.mxu0 0
      %595 = vmatprep.subr.bf16.mxu0 0
      %596 = vmatpush1.bf16.msra.mxu0 0
      %597 = vmatprep.subr.bf16.mxu0 0
      %598 = vmatpush1.bf16.msra.mxu0 0
      %599 = vmatprep.subr.bf16.mxu0 0
      %600 = vmatpush1.bf16.msra.mxu0 0
      %601 = vmatprep.subr.bf16.mxu0 0
      %602 = vmatpush1.bf16.msra.mxu0 0
      %603 = vmatprep.subr.bf16.mxu0 0
      %604 = vmatpush1.bf16.msra.mxu0 0
      %605 = vmatprep.subr.bf16.mxu0 0
      %606 = vmatpush1.bf16.msra.mxu0 0
      %607 = vmatprep.mubr.bf16.mxu0 0
      %608 = vmatmul.mubr.bf16.gmra.mrb[0].mxu0 %v567
      %v609 = vpop.f32.mrb[0].mxu0
      %v610 = vadd.f32 0.0, %v609
      %v611 = vpop.f32.mrb[0].mxu0
      %v612 = vadd.f32 0.0, %v611
      %v613 = vpop.f32.mrb[0].mxu0
      %v614 = vadd.f32 0.0, %v613
      %v615 = vpop.f32.mrb[0].mxu0
      %v616 = vadd.f32 0.0, %v615
      %617 = vdwg.mxu0
      %v618 = vadd.f32 %v519, %v610
      %v619 = vadd.f32 %v520, %v612
      %v620 = vadd.f32 %v521, %v614
      %v621 = vadd.f32 %v522, %v616
      %v622 = vld [vmem:[%s190] sm:$0x3f]
      %v623 = vld [vmem:[%s1] sm:$0xf]
      %v624 = vld [vmem:[%s1 + $0x4] sm:$0xf]
      %v627 = vunpack.c.l.b16 %v623
      %v628 = vunpack.c.l.b16 %v624
      %v629 = vpack.c.b16 %v628, %v627
      %630 = vrot.lane.b32.xlu0 %v629, 116
      %v631 = vpop.permute.xlu0 %630
      %v633 = vcombine.high %v622, %v622
      %v635 = vunpack.c.l.s4 1983009808
      %v636 = vunpack.c.0.s8 %v635
      %v637 = vlaneseq
      %v638 = vshrl.u32 %v637, 7
      %v639 = vsub.s32 %v636, %v638
      %v640 = vrot.slane %v622, %v639
      %v642 = vunpack.c.l.s4 1983009808
      %v643 = vunpack.c.0.s8 %v642
      %v644 = vlaneseq
      %v645 = vshrl.u32 %v644, 7
      %v646 = vsub.s32 %v643, %v645
      %v647 = vrot.slane %v633, %v646
      %v648 = vcombine.high %v640, %v640
      %649 = vrot.lane.b32.xlu0 %v640, 111
      %v650 = vpop.permute.xlu0 %649
      %651 = vrot.lane.b32.xlu0 %v648, 111
      %v652 = vpop.permute.xlu0 %651
      %653 = vrot.lane.b32.xlu0 %v647, 111
      %v654 = vpop.permute.xlu0 %653
      %vm655 = vcmask 908288
      %v656 = vsel %vm655, %v650, %v652
      %v657 = vsel %vm655, %v652, %v654
      %v659 = vsel %vm282, %v631, 0
      %v662 = vand.u32 %v656, %v289
      %v665 = vand.u32 %v657, %v289
      %667 = vmatprep.subr.bf16.mxu0 %v665
      %668 = vmatpush1.bf16.msra.mxu0 %v662
      %669 = vmatprep.subr.bf16.mxu0 0
      %670 = vmatpush1.bf16.msra.mxu0 0
      %671 = vmatprep.subr.bf16.mxu0 0
      %672 = vmatpush1.bf16.msra.mxu0 0
      %673 = vmatprep.subr.bf16.mxu0 0
      %674 = vmatpush1.bf16.msra.mxu0 0
      %675 = vmatprep.subr.bf16.mxu0 0
      %676 = vmatpush1.bf16.msra.mxu0 0
      %677 = vmatprep.subr.bf16.mxu0 0
      %678 = vmatpush1.bf16.msra.mxu0 0
      %679 = vmatprep.subr.bf16.mxu0 0
      %680 = vmatpush1.bf16.msra.mxu0 0
      %681 = vmatprep.subr.bf16.mxu0 0
      %682 = vmatpush1.bf16.msra.mxu0 0
      %683 = vmatprep.subr.bf16.mxu0 0
      %684 = vmatpush1.bf16.msra.mxu0 0
      %685 = vmatprep.subr.bf16.mxu0 0
      %686 = vmatpush1.bf16.msra.mxu0 0
      %687 = vmatprep.subr.bf16.mxu0 0
      %688 = vmatpush1.bf16.msra.mxu0 0
      %689 = vmatprep.subr.bf16.mxu0 0
      %690 = vmatpush1.bf16.msra.mxu0 0
      %691 = vmatprep.subr.bf16.mxu0 0
      %692 = vmatpush1.bf16.msra.mxu0 0
      %693 = vmatprep.subr.bf16.mxu0 0
      %694 = vmatpush1.bf16.msra.mxu0 0
      %695 = vmatprep.subr.bf16.mxu0 0
      %696 = vmatpush1.bf16.msra.mxu0 0
      %697 = vmatprep.subr.bf16.mxu0 0
      %698 = vmatpush1.bf16.msra.mxu0 0
      %699 = vmatprep.mubr.bf16.mxu0 0
      %700 = vmatmul.mubr.bf16.gmra.mrb[0].mxu0 %v659
      %v701 = vpop.f32.mrb[0].mxu0
      %v702 = vadd.f32 0.0, %v701
      %v703 = vpop.f32.mrb[0].mxu0
      %v704 = vadd.f32 0.0, %v703
      %v705 = vpop.f32.mrb[0].mxu0
      %v706 = vadd.f32 0.0, %v705
      %v707 = vpop.f32.mrb[0].mxu0
      %v708 = vadd.f32 0.0, %v707
      %709 = vdwg.mxu0
      %v710 = vadd.f32 %v618, %v702
      %v711 = vadd.f32 %v619, %v704
      %v712 = vadd.f32 %v620, %v706
      %v713 = vadd.f32 %v621, %v708
      %v714 = vld [vmem:[%s190] sm:$0x3f]
      %715 = vrot.lane.b32.xlu0 %v424, 18
      %v716 = vpop.permute.xlu0 %715
      %v717 = vrot.slane %v716, 6
      %vm718 = vcmask 146432
      %v719 = vsel %vm718, %v717, %v716
      %v721 = vmul.bf16 %v714, %v719
      %v722 = vld [vmem:[%s1] sm:$0xf]
      %v723 = vld [vmem:[%s1 + $0x4] sm:$0xf]
      %v726 = vunpack.c.l.b16 %v722
      %v727 = vunpack.c.l.b16 %v723
      %v728 = vpack.c.b16 %v727, %v726
      %729 = vrot.lane.b32.xlu0 %v728, 113
      %v730 = vpop.permute.xlu0 %729
      %v732 = vcombine.high %v721, %v721
      %v734 = vunpack.c.l.s4 1983009808
      %v735 = vunpack.c.0.s8 %v734
      %v736 = vlaneseq
      %v737 = vshrl.u32 %v736, 7
      %v738 = vsub.s32 %v735, %v737
      %v739 = vrot.slane %v721, %v738
      %v741 = vunpack.c.l.s4 1983009808
      %v742 = vunpack.c.0.s8 %v741
      %v743 = vlaneseq
      %v744 = vshrl.u32 %v743, 7
      %v745 = vsub.s32 %v742, %v744
      %v746 = vrot.slane %v732, %v745
      %v747 = vcombine.high %v739, %v739
      %748 = vrot.lane.b32.xlu0 %v739, 110
      %v749 = vpop.permute.xlu0 %748
      %750 = vrot.lane.b32.xlu0 %v747, 110
      %v751 = vpop.permute.xlu0 %750
      %752 = vrot.lane.b32.xlu0 %v746, 110
      %v753 = vpop.permute.xlu0 %752
      %vm754 = vcmask 900096
      %v755 = vsel %vm754, %v749, %v751
      %v756 = vsel %vm754, %v751, %v753
      %v758 = vsel %vm282, %v730, 0
      %v761 = vand.u32 %v755, %v289
      %v764 = vand.u32 %v756, %v289
      %766 = vmatprep.subr.bf16.mxu0 %v764
      %767 = vmatpush1.bf16.msra.mxu0 %v761
      %768 = vmatprep.subr.bf16.mxu0 0
      %769 = vmatpush1.bf16.msra.mxu0 0
      %770 = vmatprep.subr.bf16.mxu0 0
      %771 = vmatpush1.bf16.msra.mxu0 0
      %772 = vmatprep.subr.bf16.mxu0 0
      %773 = vmatpush1.bf16.msra.mxu0 0
      %774 = vmatprep.subr.bf16.mxu0 0
      %775 = vmatpush1.bf16.msra.mxu0 0
      %776 = vmatprep.subr.bf16.mxu0 0
      %777 = vmatpush1.bf16.msra.mxu0 0
      %778 = vmatprep.subr.bf16.mxu0 0
      %779 = vmatpush1.bf16.msra.mxu0 0
      %780 = vmatprep.subr.bf16.mxu0 0
      %781 = vmatpush1.bf16.msra.mxu0 0
      %782 = vmatprep.subr.bf16.mxu0 0
      %783 = vmatpush1.bf16.msra.mxu0 0
      %784 = vmatprep.subr.bf16.mxu0 0
      %785 = vmatpush1.bf16.msra.mxu0 0
      %786 = vmatprep.subr.bf16.mxu0 0
      %787 = vmatpush1.bf16.msra.mxu0 0
      %788 = vmatprep.subr.bf16.mxu0 0
      %789 = vmatpush1.bf16.msra.mxu0 0
      %790 = vmatprep.subr.bf16.mxu0 0
      %791 = vmatpush1.bf16.msra.mxu0 0
      %792 = vmatprep.subr.bf16.mxu0 0
      %793 = vmatpush1.bf16.msra.mxu0 0
      %794 = vmatprep.subr.bf16.mxu0 0
      %795 = vmatpush1.bf16.msra.mxu0 0
      %796 = vmatprep.subr.bf16.mxu0 0
      %797 = vmatpush1.bf16.msra.mxu0 0
      %798 = vmatprep.mubr.bf16.mxu0 0
      %799 = vmatmul.mubr.bf16.gmra.mrb[0].mxu0 %v758
      %v800 = vpop.f32.mrb[0].mxu0
      %v801 = vadd.f32 0.0, %v800
      %v802 = vpop.f32.mrb[0].mxu0
      %v803 = vadd.f32 0.0, %v802
      %v804 = vpop.f32.mrb[0].mxu0
      %v805 = vadd.f32 0.0, %v804
      %v806 = vpop.f32.mrb[0].mxu0
      %v807 = vadd.f32 0.0, %v806
      %808 = vdwg.mxu0
      %v809 = vadd.f32 %v710, %v801
      %v810 = vadd.f32 %v711, %v803
      %v811 = vadd.f32 %v712, %v805
      %v812 = vadd.f32 %v713, %v807
      %v813 = vld [vmem:[%s190] sm:$0x3f]
      %814 = vrot.lane.b32.xlu0 %v243, 32
      %v815 = vpop.permute.xlu0 %814
      %v816 = vrot.slane %v815, 6
      %vm817 = vcmask 261120
      %v818 = vsel %vm817, %v816, %v815
      %v820 = vmul.bf16 %v813, %v818
      %v821 = vld [vmem:[%s1] sm:$0xf]
      %v822 = vld [vmem:[%s1 + $0x4] sm:$0xf]
      %v825 = vunpack.c.l.b16 %v821
      %v826 = vunpack.c.l.b16 %v822
      %v827 = vpack.c.b16 %v826, %v825
      %828 = vrot.lane.b32.xlu0 %v827, 110
      %v829 = vpop.permute.xlu0 %828
      %v831 = vcombine.high %v820, %v820
      %v833 = vunpack.c.l.s4 1983009808
      %v834 = vunpack.c.0.s8 %v833
      %v835 = vlaneseq
      %v836 = vshrl.u32 %v835, 7
      %v837 = vsub.s32 %v834, %v836
      %v838 = vrot.slane %v820, %v837
      %v840 = vunpack.c.l.s4 1983009808
      %v841 = vunpack.c.0.s8 %v840
      %v842 = vlaneseq
      %v843 = vshrl.u32 %v842, 7
      %v844 = vsub.s32 %v841, %v843
      %v845 = vrot.slane %v831, %v844
      %v846 = vcombine.high %v838, %v838
      %847 = vrot.lane.b32.xlu0 %v838, 96
      %v848 = vpop.permute.xlu0 %847
      %849 = vrot.lane.b32.xlu0 %v846, 96
      %v850 = vpop.permute.xlu0 %849
      %851 = vrot.lane.b32.xlu0 %v845, 96
      %v852 = vpop.permute.xlu0 %851
      %vm853 = vcmask 785408
      %v854 = vsel %vm853, %v848, %v850
      %v855 = vsel %vm853, %v850, %v852
      %v857 = vsel %vm282, %v829, 0
      %v860 = vand.u32 %v854, %v289
      %v863 = vand.u32 %v855, %v289
      %865 = vmatprep.subr.bf16.mxu0 %v863
      %866 = vmatpush1.bf16.msra.mxu0 %v860
      %867 = vmatprep.subr.bf16.mxu0 0
      %868 = vmatpush1.bf16.msra.mxu0 0
      %869 = vmatprep.subr.bf16.mxu0 0
      %870 = vmatpush1.bf16.msra.mxu0 0
      %871 = vmatprep.subr.bf16.mxu0 0
      %872 = vmatpush1.bf16.msra.mxu0 0
      %873 = vmatprep.subr.bf16.mxu0 0
      %874 = vmatpush1.bf16.msra.mxu0 0
      %875 = vmatprep.subr.bf16.mxu0 0
      %876 = vmatpush1.bf16.msra.mxu0 0
      %877 = vmatprep.subr.bf16.mxu0 0
      %878 = vmatpush1.bf16.msra.mxu0 0
      %879 = vmatprep.subr.bf16.mxu0 0
      %880 = vmatpush1.bf16.msra.mxu0 0
      %881 = vmatprep.subr.bf16.mxu0 0
      %882 = vmatpush1.bf16.msra.mxu0 0
      %883 = vmatprep.subr.bf16.mxu0 0
      %884 = vmatpush1.bf16.msra.mxu0 0
      %885 = vmatprep.subr.bf16.mxu0 0
      %886 = vmatpush1.bf16.msra.mxu0 0
      %887 = vmatprep.subr.bf16.mxu0 0
      %888 = vmatpush1.bf16.msra.mxu0 0
      %889 = vmatprep.subr.bf16.mxu0 0
      %890 = vmatpush1.bf16.msra.mxu0 0
      %891 = vmatprep.subr.bf16.mxu0 0
      %892 = vmatpush1.bf16.msra.mxu0 0
      %893 = vmatprep.subr.bf16.mxu0 0
      %894 = vmatpush1.bf16.msra.mxu0 0
      %895 = vmatprep.subr.bf16.mxu0 0
      %896 = vmatpush1.bf16.msra.mxu0 0
      %897 = vmatprep.mubr.bf16.mxu0 0
      %898 = vmatmul.mubr.bf16.gmra.mrb[0].mxu0 %v857
      %v899 = vpop.f32.mrb[0].mxu0
      %v900 = vadd.f32 0.0, %v899
      %v901 = vpop.f32.mrb[0].mxu0
      %v902 = vadd.f32 0.0, %v901
      %v903 = vpop.f32.mrb[0].mxu0
      %v904 = vadd.f32 0.0, %v903
      %v905 = vpop.f32.mrb[0].mxu0
      %v906 = vadd.f32 0.0, %v905
      %907 = vdwg.mxu0
      %v908 = vadd.f32 %v809, %v900
      %v909 = vadd.f32 %v810, %v902
      %v910 = vadd.f32 %v811, %v904
      %v911 = vadd.f32 %v812, %v906
      %v912 = vld [vmem:[%s190] sm:$0x3f]
      %v913 = vld [vmem:[%s1] sm:$0xf]
      %v914 = vld [vmem:[%s1 + $0x4] sm:$0xf]
      %v917 = vunpack.c.l.b16 %v913
      %v918 = vunpack.c.l.b16 %v914
      %v919 = vpack.c.b16 %v918, %v917
      %920 = vrot.lane.b32.xlu0 %v919, 107
      %v921 = vpop.permute.xlu0 %920
      %v923 = vcombine.high %v912, %v912
      %v925 = vunpack.c.l.s4 1983009808
      %v926 = vunpack.c.0.s8 %v925
      %v927 = vlaneseq
      %v928 = vshrl.u32 %v927, 7
      %v929 = vsub.s32 %v926, %v928
      %v930 = vrot.slane %v912, %v929
      %v932 = vunpack.c.l.s4 1983009808
      %v933 = vunpack.c.0.s8 %v932
      %v934 = vlaneseq
      %v935 = vshrl.u32 %v934, 7
      %v936 = vsub.s32 %v933, %v935
      %v937 = vrot.slane %v923, %v936
      %v938 = vcombine.high %v930, %v930
      %939 = vrot.lane.b32.xlu0 %v930, 95
      %v940 = vpop.permute.xlu0 %939
      %941 = vrot.lane.b32.xlu0 %v938, 95
      %v942 = vpop.permute.xlu0 %941
      %943 = vrot.lane.b32.xlu0 %v937, 95
      %v944 = vpop.permute.xlu0 %943
      %vm945 = vcmask 777216
      %v946 = vsel %vm945, %v940, %v942
      %v947 = vsel %vm945, %v942, %v944
      %v949 = vsel %vm282, %v921, 0
      %v952 = vand.u32 %v946, %v289
      %v955 = vand.u32 %v947, %v289
      %957 = vmatprep.subr.bf16.mxu0 %v955
      %958 = vmatpush1.bf16.msra.mxu0 %v952
      %959 = vmatprep.subr.bf16.mxu0 0
      %960 = vmatpush1.bf16.msra.mxu0 0
      %961 = vmatprep.subr.bf16.mxu0 0
      %962 = vmatpush1.bf16.msra.mxu0 0
      %963 = vmatprep.subr.bf16.mxu0 0
      %964 = vmatpush1.bf16.msra.mxu0 0
      %965 = vmatprep.subr.bf16.mxu0 0
      %966 = vmatpush1.bf16.msra.mxu0 0
      %967 = vmatprep.subr.bf16.mxu0 0
      %968 = vmatpush1.bf16.msra.mxu0 0
      %969 = vmatprep.subr.bf16.mxu0 0
      %970 = vmatpush1.bf16.msra.mxu0 0
      %971 = vmatprep.subr.bf16.mxu0 0
      %972 = vmatpush1.bf16.msra.mxu0 0
      %973 = vmatprep.subr.bf16.mxu0 0
      %974 = vmatpush1.bf16.msra.mxu0 0
      %975 = vmatprep.subr.bf16.mxu0 0
      %976 = vmatpush1.bf16.msra.mxu0 0
      %977 = vmatprep.subr.bf16.mxu0 0
      %978 = vmatpush1.bf16.msra.mxu0 0
      %979 = vmatprep.subr.bf16.mxu0 0
      %980 = vmatpush1.bf16.msra.mxu0 0
      %981 = vmatprep.subr.bf16.mxu0 0
      %982 = vmatpush1.bf16.msra.mxu0 0
      %983 = vmatprep.subr.bf16.mxu0 0
      %984 = vmatpush1.bf16.msra.mxu0 0
      %985 = vmatprep.subr.bf16.mxu0 0
      %986 = vmatpush1.bf16.msra.mxu0 0
      %987 = vmatprep.subr.bf16.mxu0 0
      %988 = vmatpush1.bf16.msra.mxu0 0
      %989 = vmatprep.mubr.bf16.mxu0 0
      %990 = vmatmul.mubr.bf16.gmra.mrb[0].mxu0 %v949
      %v991 = vpop.f32.mrb[0].mxu0
      %v992 = vadd.f32 0.0, %v991
      %v993 = vpop.f32.mrb[0].mxu0
      %v994 = vadd.f32 0.0, %v993
      %v995 = vpop.f32.mrb[0].mxu0
      %v996 = vadd.f32 0.0, %v995
      %v997 = vpop.f32.mrb[0].mxu0
      %v998 = vadd.f32 0.0, %v997
      %999 = vdwg.mxu0
      %v1000 = vadd.f32 %v908, %v992
      %v1001 = vadd.f32 %v909, %v994
      %v1002 = vadd.f32 %v910, %v996
      %v1003 = vadd.f32 %v911, %v998
      %v1004 = vld [vmem:[%s190] sm:$0x3f]
      %1005 = vrot.lane.b32.xlu0 %v424, 34
      %v1006 = vpop.permute.xlu0 %1005
      %v1007 = vrot.slane %v1006, 6
      %vm1008 = vcmask 277504
      %v1009 = vsel %vm1008, %v1007, %v1006
      %v1011 = vmul.bf16 %v1004, %v1009
      %v1012 = vld [vmem:[%s1] sm:$0xf]
      %v1013 = vld [vmem:[%s1 + $0x4] sm:$0xf]
      %v1016 = vunpack.c.l.b16 %v1012
      %v1017 = vunpack.c.l.b16 %v1013
      %v1018 = vpack.c.b16 %v1017, %v1016
      %1019 = vrot.lane.b32.xlu0 %v1018, 104
      %v1020 = vpop.permute.xlu0 %1019
      %v1022 = vcombine.high %v1011, %v1011
      %v1024 = vunpack.c.l.s4 1983009808
      %v1025 = vunpack.c.0.s8 %v1024
      %v1026 = vlaneseq
      %v1027 = vshrl.u32 %v1026, 7
      %v1028 = vsub.s32 %v1025, %v1027
      %v1029 = vrot.slane %v1011, %v1028
      %v1031 = vunpack.c.l.s4 1983009808
      %v1032 = vunpack.c.0.s8 %v1031
      %v1033 = vlaneseq
      %v1034 = vshrl.u32 %v1033, 7
      %v1035 = vsub.s32 %v1032, %v1034
      %v1036 = vrot.slane %v1022, %v1035
      %v1037 = vcombine.high %v1029, %v1029
      %1038 = vrot.lane.b32.xlu0 %v1029, 94
      %v1039 = vpop.permute.xlu0 %1038
      %1040 = vrot.lane.b32.xlu0 %v1037, 94
      %v1041 = vpop.permute.xlu0 %1040
      %1042 = vrot.lane.b32.xlu0 %v1036, 94
      %v1043 = vpop.permute.xlu0 %1042
      %vm1044 = vcmask 769024
      %v1045 = vsel %vm1044, %v1039, %v1041
      %v1046 = vsel %vm1044, %v1041, %v1043
      %v1048 = vsel %vm282, %v1020, 0
      %v1051 = vand.u32 %v1045, %v289
      %v1054 = vand.u32 %v1046, %v289
      %1056 = vmatprep.subr.bf16.mxu0 %v1054
      %1057 = vmatpush1.bf16.msra.mxu0 %v1051
      %1058 = vmatprep.subr.bf16.mxu0 0
      %1059 = vmatpush1.bf16.msra.mxu0 0
      %1060 = vmatprep.subr.bf16.mxu0 0
      %1061 = vmatpush1.bf16.msra.mxu0 0
      %1062 = vmatprep.subr.bf16.mxu0 0
      %1063 = vmatpush1.bf16.msra.mxu0 0
      %1064 = vmatprep.subr.bf16.mxu0 0
      %1065 = vmatpush1.bf16.msra.mxu0 0
      %1066 = vmatprep.subr.bf16.mxu0 0
      %1067 = vmatpush1.bf16.msra.mxu0 0
      %1068 = vmatprep.subr.bf16.mxu0 0
      %1069 = vmatpush1.bf16.msra.mxu0 0
      %1070 = vmatprep.subr.bf16.mxu0 0
      %1071 = vmatpush1.bf16.msra.mxu0 0
      %1072 = vmatprep.subr.bf16.mxu0 0
      %1073 = vmatpush1.bf16.msra.mxu0 0
      %1074 = vmatprep.subr.bf16.mxu0 0
      %1075 = vmatpush1.bf16.msra.mxu0 0
      %1076 = vmatprep.subr.bf16.mxu0 0
      %1077 = vmatpush1.bf16.msra.mxu0 0
      %1078 = vmatprep.subr.bf16.mxu0 0
      %1079 = vmatpush1.bf16.msra.mxu0 0
      %1080 = vmatprep.subr.bf16.mxu0 0
      %1081 = vmatpush1.bf16.msra.mxu0 0
      %1082 = vmatprep.subr.bf16.mxu0 0
      %1083 = vmatpush1.bf16.msra.mxu0 0
      %1084 = vmatprep.subr.bf16.mxu0 0
      %1085 = vmatpush1.bf16.msra.mxu0 0
      %1086 = vmatprep.subr.bf16.mxu0 0
      %1087 = vmatpush1.bf16.msra.mxu0 0
      %1088 = vmatprep.mubr.bf16.mxu0 0
      %1089 = vmatmul.mubr.bf16.gmra.mrb[0].mxu0 %v1048
      %v1090 = vpop.f32.mrb[0].mxu0
      %v1091 = vadd.f32 0.0, %v1090
      %v1092 = vpop.f32.mrb[0].mxu0
      %v1093 = vadd.f32 0.0, %v1092
      %v1094 = vpop.f32.mrb[0].mxu0
      %v1095 = vadd.f32 0.0, %v1094
      %v1096 = vpop.f32.mrb[0].mxu0
      %v1097 = vadd.f32 0.0, %v1096
      %1098 = vdwg.mxu0
      %v1099 = vadd.f32 %v1000, %v1091
      %v1100 = vadd.f32 %v1001, %v1093
      %v1101 = vadd.f32 %v1002, %v1095
      %v1102 = vadd.f32 %v1003, %v1097
      %v1103 = vld [vmem:[%s2] sm:$0xff]
      %v1104 = vld [vmem:[%s2 + $0x8] sm:$0xff]
      %1106 = vset.pattern.permute.xlu0 0
      %1107 = vperm.xlu0 %1106, %v1103
      %v1108 = vpop.permute.xlu0 %1107
      %1111 = vset.pattern.permute.xlu0 0
      %1112 = vperm.xlu0 %1111, %v1104
      %v1113 = vpop.permute.xlu0 %1112
      %v1115 = vadd.f32 %v1099, %v1108
      %v1116 = vadd.f32 %v1100, %v1108
      %v1117 = vadd.f32 %v1101, %v1113
      %v1118 = vadd.f32 %v1102, %v1113
      %v1119 = vmax.f32 %v1115, 0.0
      %v1120 = vmax.f32 %v1116, 0.0
      %v1121 = vmax.f32 %v1117, 0.0
      %v1122 = vmax.f32 %v1118, 0.0
      %1123 = vmatprep.subr.mxu0 %v1120
      %1124 = vmatpush1.xpose.msra.mxu0 %v1119
      %1125 = vmatprep.subr.mxu0 %v1122
      %1126 = vmatpush1.xpose.msra.mxu0 %v1121
      %1127 = vmatprep.subr.mxu0 0.0
      %1128 = vmatpush1.xpose.msra.mxu0 0.0
      %1129 = vmatprep.subr.mxu0 0.0
      %1130 = vmatpush1.xpose.msra.mxu0 0.0
      %1131 = vmatprep.subr.mxu0 0.0
      %1132 = vmatpush1.xpose.msra.mxu0 0.0
      %1133 = vmatprep.subr.mxu0 0.0
      %1134 = vmatpush1.xpose.msra.mxu0 0.0
      %1135 = vmatprep.subr.mxu0 0.0
      %1136 = vmatpush1.xpose.msra.mxu0 0.0
      %1137 = vmatprep.subr.mxu0 0.0
      %1138 = vmatpush1.xpose.msra.mxu0 0.0
      %1139 = vmatprep.subr.mxu0 0.0
      %1140 = vmatpush1.xpose.msra.mxu0 0.0
      %1141 = vmatprep.subr.mxu0 0.0
      %1142 = vmatpush1.xpose.msra.mxu0 0.0
      %1143 = vmatprep.subr.mxu0 0.0
      %1144 = vmatpush1.xpose.msra.mxu0 0.0
      %1145 = vmatprep.subr.mxu0 0.0
      %1146 = vmatpush1.xpose.msra.mxu0 0.0
      %1147 = vmatprep.subr.mxu0 0.0
      %1148 = vmatpush1.xpose.msra.mxu0 0.0
      %1149 = vmatprep.subr.mxu0 0.0
      %1150 = vmatpush1.xpose.msra.mxu0 0.0
      %1151 = vmatprep.subr.mxu0 0.0
      %1152 = vmatpush1.xpose.msra.mxu0 0.0
      %1153 = vmatprep.subr.mxu0 0.0
      %1154 = vmatpush1.xpose.msra.mxu0 0.0
      %1155 = vmatprep.subr.mxu0 0.0
      %1156 = vmatpush1.xpose.msra.mxu0 0.0
      %1157 = vmatprep.subr.mxu0 0.0
      %1158 = vmatpush1.xpose.msra.mxu0 0.0
      %1159 = vmatprep.subr.mxu0 0.0
      %1160 = vmatpush1.xpose.msra.mxu0 0.0
      %1161 = vmatprep.subr.mxu0 0.0
      %1162 = vmatpush1.xpose.msra.mxu0 0.0
      %1163 = vmatprep.subr.mxu0 0.0
      %1164 = vmatpush1.xpose.msra.mxu0 0.0
      %1165 = vmatprep.subr.mxu0 0.0
      %1166 = vmatpush1.xpose.msra.mxu0 0.0
      %1167 = vmatprep.subr.mxu0 0.0
      %1168 = vmatpush1.xpose.msra.mxu0 0.0
      %1169 = vmatprep.subr.mxu0 0.0
      %1170 = vmatpush1.xpose.msra.mxu0 0.0
      %1171 = vmatprep.subr.mxu0 0.0
      %1172 = vmatpush1.xpose.msra.mxu0 0.0
      %1173 = vmatprep.subr.mxu0 0.0
      %1174 = vmatpush1.xpose.msra.mxu0 0.0
      %1175 = vmatprep.subr.mxu0 0.0
      %1176 = vmatpush1.xpose.msra.mxu0 0.0
      %1177 = vmatprep.subr.mxu0 0.0
      %1178 = vmatpush1.xpose.msra.mxu0 0.0
      %1179 = vmatprep.subr.mxu0 0.0
      %1180 = vmatpush1.xpose.msra.mxu0 0.0
      %1181 = vmatprep.subr.mxu0 0.0
      %1182 = vmatpush1.xpose.msra.mxu0 0.0
      %1183 = vmatprep.subr.mxu0 0.0
      %1184 = vmatpush1.xpose.msra.mxu0 0.0
      %1185 = vmatprep.subr.mxu0 0.0
      %1186 = vmatpush1.xpose.msra.mxu0 0.0
      %1187 = vmatprep.mubr.f32.mxu0 1.0
      %1188 = vmatmul.mubr.f32.gmra.mrb[0].mxu0 1.0
      %v1189 = vpop.f32.mrb[0].mxu0
      %v1190 = vadd.f32 0.0, %v1189
      %v1191 = vpop.f32.mrb[0].mxu0
      %1192 = vdwg.mxu0
      %v1193 = vmul.f32 %v1190, 0.00390625
      %vm1194 = vcmask 122880
      %1195 = vst.msk [vmem:[%s193] sm:$0x1] %vm1194, %v1193
      %p1196 = scmp.lt.s32.totalorder %s15, 1
      %s1197 = scalar_select %p1196, %s15, 1
      %s1198 = scalar_lea.vmem %s4, %s1197
      // Predicated region
      $region37: #{swin_resnet_att_forward.4} parent=35 // pred_check
        %p1199 = pneg %p122
      $region38: #{swin_resnet_att_forward.4} parent=35 // pred_check_branch
        %1201 = sbr.rel (%p1199) target = $region40
      $region39: #{swin_resnet_att_forward.4} parent=35 // pred_region
        _
      $region40: #{swin_resnet_att_forward.4} parent=35 // pred_fallthru
        _
    $region36: #{swin_resnet_att_forward.4} parent=5 // pred_fallthru
      _
    %p1202 = scmp.le.s32.totalorder 2, %s10
    // Predicated region
    $region41: #{swin_resnet_att_forward.4} parent=5 // pred_check
      %p1203 = pneg %p1202
    $region42: #{swin_resnet_att_forward.4} parent=5 // pred_check_branch
      %1205 = sbr.rel (%p1203) target = $region44
    $region43: #{swin_resnet_att_forward.4} parent=5 // pred_region
      %s1206 = ssub.s32 %s10, 2
      // Predicated region
      $region45: #{swin_resnet_att_forward.4} parent=43 // pred_check
        %p1207 = pneg %p128
      $region46: #{swin_resnet_att_forward.4} parent=43 // pred_check_branch
        %1209 = sbr.rel (%p1207) target = $region48
      $region47: #{swin_resnet_att_forward.4} parent=43 // pred_region
        %p1210 = scmp.lt.s32.totalorder %s16, 1
        %s1211 = scalar_select %p1210, %s16, 1
        %s1212 = scalar_lea.vmem %s4, %s1211
      $region48: #{swin_resnet_att_forward.4} parent=43 // pred_fallthru
        _
    $region44: #{swin_resnet_att_forward.4} parent=5 // pred_fallthru
      _
  $region6: #{swin_resnet_att_forward.4} parent=0 // loop_footer
    %s14 = sadd.s32 1, %s10
  $region7: #{swin_resnet_att_forward.4} parent=0 // loop_footer_branch
    %9 = sbr.rel target = $region3
  $region8: #{swin_resnet_att_forward.4} parent=0 // loop_exit
    _

// kernel: swin_resnet_att_forward.5
$region0: #{swin_resnet_att_forward.5}
  #allocation0 [shape = 'u32[]', space=smem, size = 0x4, offset = 0x4, fixed_abs, tag = 'smem constant byte address 0x4 - core index']
  #allocation1 [shape = 'u32[144,128]{1,0:T(1,128)}', space=vmem, size = 0x12000, scoped, tag = 'internal scratch']
  #allocation2 [shape = 'f32[1]{0:T(128)S(6)}', space=smem, size = 0x200, scoped, tag = 'scoped memory for swin_resnet_att_forward.5']
  %s0 = inlined_call_operand.vmem [shape: f32[2,32], index: 0, kind: input, shape index: {}]
  %s1 = inlined_call_operand.vmem [shape: f32[2,16], index: 1, kind: input, shape index: {}]
  %s2 = inlined_call_operand.vmem [shape: f32[32,128], index: 2, kind: input, shape index: {}]
  %s3 = inlined_call_operand.vmem [shape: f32[1,128], index: 3, kind: input, shape index: {}]
  %s4 = inlined_call_operand.vmem [shape: f32[16,128], index: 4, kind: input, shape index: {}]
  %s5 = inlined_call_operand.vmem [shape: f32[1,128], index: 5, kind: input, shape index: {}]
  %s6 = inlined_call_operand.vmem [shape: f32[128,128], index: 6, kind: input, shape index: {}]
  %s7 = inlined_call_operand.vmem [shape: f32[1,128], index: 7, kind: input, shape index: {}]
  %s8 = inlined_call_operand.vmem [shape: f32[1,128], index: 8, kind: input, shape index: {}]
  %s9 = inlined_call_operand.<no memory space> [shape: f32[1], index: 9, kind: input, shape index: {}]
  %s10 = inlined_call_operand.vmem [shape: f32[2,128], index: 10, kind: output, shape index: {}]
  %s11 = sld [smem:[#allocation0]]
  $region50: #{swin_resnet_att_forward.5} parent=0
    _
  %s13 = ssub.s32 1, %s11
  %s14 = scalar_select 0, %s13, %s11
  %15 = sst [smem:[#allocation2]] %s9
  // Predicated region
  $region2: #{swin_resnet_att_forward.5} parent=0 // pred_check
    _
  $region3: #{swin_resnet_att_forward.5} parent=0 // pred_check_branch
    %17 = sbr.rel (0) target = $region5
  $region4: #{swin_resnet_att_forward.5} parent=0 // pred_region
    _
  $region5: #{swin_resnet_att_forward.5} parent=0 // pred_fallthru
    _
  // Predicated region
  $region6: #{swin_resnet_att_forward.5} parent=0 // pred_check
    _
  $region7: #{swin_resnet_att_forward.5} parent=0 // pred_check_branch
    %19 = sbr.rel (0) target = $region9
  $region8: #{swin_resnet_att_forward.5} parent=0 // pred_region
    _
  $region9: #{swin_resnet_att_forward.5} parent=0 // pred_fallthru
    _
  // Predicated region
  $region10: #{swin_resnet_att_forward.5} parent=0 // pred_check
    _
  $region11: #{swin_resnet_att_forward.5} parent=0 // pred_check_branch
    %21 = sbr.rel (0) target = $region13
  $region12: #{swin_resnet_att_forward.5} parent=0 // pred_region
    _
  $region13: #{swin_resnet_att_forward.5} parent=0 // pred_fallthru
    _
  // Predicated region
  $region14: #{swin_resnet_att_forward.5} parent=0 // pred_check
    _
  $region15: #{swin_resnet_att_forward.5} parent=0 // pred_check_branch
    %23 = sbr.rel (0) target = $region17
  $region16: #{swin_resnet_att_forward.5} parent=0 // pred_region
    _
  $region17: #{swin_resnet_att_forward.5} parent=0 // pred_fallthru
    _
  // Predicated region
  $region18: #{swin_resnet_att_forward.5} parent=0 // pred_check
    _
  $region19: #{swin_resnet_att_forward.5} parent=0 // pred_check_branch
    %25 = sbr.rel (0) target = $region21
  $region20: #{swin_resnet_att_forward.5} parent=0 // pred_region
    _
  $region21: #{swin_resnet_att_forward.5} parent=0 // pred_fallthru
    _
  // Predicated region
  $region22: #{swin_resnet_att_forward.5} parent=0 // pred_check
    _
  $region23: #{swin_resnet_att_forward.5} parent=0 // pred_check_branch
    %27 = sbr.rel (0) target = $region25
  $region24: #{swin_resnet_att_forward.5} parent=0 // pred_region
    _
  $region25: #{swin_resnet_att_forward.5} parent=0 // pred_fallthru
    _
  // Predicated region
  $region26: #{swin_resnet_att_forward.5} parent=0 // pred_check
    _
  $region27: #{swin_resnet_att_forward.5} parent=0 // pred_check_branch
    %29 = sbr.rel (0) target = $region29
  $region28: #{swin_resnet_att_forward.5} parent=0 // pred_region
    _
  $region29: #{swin_resnet_att_forward.5} parent=0 // pred_fallthru
    _
  // Predicated region
  $region30: #{swin_resnet_att_forward.5} parent=0 // pred_check
    _
  $region31: #{swin_resnet_att_forward.5} parent=0 // pred_check_branch
    %31 = sbr.rel (0) target = $region33
  $region32: #{swin_resnet_att_forward.5} parent=0 // pred_region
    _
  $region33: #{swin_resnet_att_forward.5} parent=0 // pred_fallthru
    _
  // Predicated region
  $region34: #{swin_resnet_att_forward.5} parent=0 // pred_check
    _
  $region35: #{swin_resnet_att_forward.5} parent=0 // pred_check_branch
    %33 = sbr.rel (0) target = $region37
  $region36: #{swin_resnet_att_forward.5} parent=0 // pred_region
    _
  $region37: #{swin_resnet_att_forward.5} parent=0 // pred_fallthru
    _
  // Predicated region
  $region38: #{swin_resnet_att_forward.5} parent=0 // pred_check
    _
  $region39: #{swin_resnet_att_forward.5} parent=0 // pred_check_branch
    %35 = sbr.rel (0) target = $region41
  $region40: #{swin_resnet_att_forward.5} parent=0 // pred_region
    _
  $region41: #{swin_resnet_att_forward.5} parent=0 // pred_fallthru
    _
  %v36 = vld [vmem:[%s0] sm:$0x3]
  %v37 = vld [vmem:[%s2] sm:$0xff]
  %v38 = vld [vmem:[%s2 + $0x8] sm:$0xff]
  %v39 = vld [vmem:[%s2 + $0x10] sm:$0xff]
  %v40 = vld [vmem:[%s2 + $0x18] sm:$0xff]
  %v41 = vld [vmem:[%s3] sm:$0x1]
  %v43 = vlaneseq
  %v44 = vshrl.u32 %v43, 7
  %v45 = vsub.s32 0, %v44
  %v46 = vrot.slane %v41, %v45
  %vm48 = vcmask 261120
  %v50 = vsel %vm48, %v36, 0
  %52 = vmatprep.subr.mxu0 0.0
  %53 = vmatpush1.msra.mxu0 %v37
  %54 = vmatprep.subr.mxu0 0.0
  %55 = vmatpush1.msra.mxu0 %v38
  %56 = vmatprep.subr.mxu0 0.0
  %57 = vmatpush1.msra.mxu0 %v39
  %58 = vmatprep.subr.mxu0 0.0
  %59 = vmatpush1.msra.mxu0 %v40
  %60 = vmatprep.subr.mxu0 0.0
  %61 = vmatpush1.msra.mxu0 0.0
  %62 = vmatprep.subr.mxu0 0.0
  %63 = vmatpush1.msra.mxu0 0.0
  %64 = vmatprep.subr.mxu0 0.0
  %65 = vmatpush1.msra.mxu0 0.0
  %66 = vmatprep.subr.mxu0 0.0
  %67 = vmatpush1.msra.mxu0 0.0
  %68 = vmatprep.subr.mxu0 0.0
  %69 = vmatpush1.msra.mxu0 0.0
  %70 = vmatprep.subr.mxu0 0.0
  %71 = vmatpush1.msra.mxu0 0.0
  %72 = vmatprep.subr.mxu0 0.0
  %73 = vmatpush1.msra.mxu0 0.0
  %74 = vmatprep.subr.mxu0 0.0
  %75 = vmatpush1.msra.mxu0 0.0
  %76 = vmatprep.subr.mxu0 0.0
  %77 = vmatpush1.msra.mxu0 0.0
  %78 = vmatprep.subr.mxu0 0.0
  %79 = vmatpush1.msra.mxu0 0.0
  %80 = vmatprep.subr.mxu0 0.0
  %81 = vmatpush1.msra.mxu0 0.0
  %82 = vmatprep.subr.mxu0 0.0
  %83 = vmatpush1.msra.mxu0 0.0
  %84 = vmatprep.subr.mxu0 0.0
  %85 = vmatpush1.msra.mxu0 0.0
  %86 = vmatprep.subr.mxu0 0.0
  %87 = vmatpush1.msra.mxu0 0.0
  %88 = vmatprep.subr.mxu0 0.0
  %89 = vmatpush1.msra.mxu0 0.0
  %90 = vmatprep.subr.mxu0 0.0
  %91 = vmatpush1.msra.mxu0 0.0
  %92 = vmatprep.subr.mxu0 0.0
  %93 = vmatpush1.msra.mxu0 0.0
  %94 = vmatprep.subr.mxu0 0.0
  %95 = vmatpush1.msra.mxu0 0.0
  %96 = vmatprep.subr.mxu0 0.0
  %97 = vmatpush1.msra.mxu0 0.0
  %98 = vmatprep.subr.mxu0 0.0
  %99 = vmatpush1.msra.mxu0 0.0
  %100 = vmatprep.subr.mxu0 0.0
  %101 = vmatpush1.msra.mxu0 0.0
  %102 = vmatprep.subr.mxu0 0.0
  %103 = vmatpush1.msra.mxu0 0.0
  %104 = vmatprep.subr.mxu0 0.0
  %105 = vmatpush1.msra.mxu0 0.0
  %106 = vmatprep.subr.mxu0 0.0
  %107 = vmatpush1.msra.mxu0 0.0
  %108 = vmatprep.subr.mxu0 0.0
  %109 = vmatpush1.msra.mxu0 0.0
  %110 = vmatprep.subr.mxu0 0.0
  %111 = vmatpush1.msra.mxu0 0.0
  %112 = vmatprep.subr.mxu0 0.0
  %113 = vmatpush1.msra.mxu0 0.0
  %114 = vmatprep.subr.mxu0 0.0
  %115 = vmatpush1.msra.mxu0 0.0
  %116 = vmatprep.mubr.f32.mxu0 0.0
  %117 = vmatmul.mubr.f32.gmra.mrb[0].mxu0 %v50
  %v118 = vpop.f32.mrb[0].mxu0
  %v119 = vadd.f32 %v46, %v118
  %v120 = vpop.f32.mrb[0].mxu0
  %121 = vdwg.mxu0
  %v122 = vld [vmem:[%s1] sm:$0x3]
  %v123 = vld [vmem:[%s4] sm:$0xff]
  %v124 = vld [vmem:[%s4 + $0x8] sm:$0xff]
  %v125 = vld [vmem:[%s5] sm:$0x1]
  %v127 = vlaneseq
  %v128 = vshrl.u32 %v127, 7
  %v129 = vsub.s32 0, %v128
  %v130 = vrot.slane %v125, %v129
  %vm132 = vcmask 130048
  %v134 = vsel %vm132, %v122, 0
  %136 = vmatprep.subr.mxu0 0.0
  %137 = vmatpush1.msra.mxu0 %v123
  %138 = vmatprep.subr.mxu0 0.0
  %139 = vmatpush1.msra.mxu0 %v124
  %140 = vmatprep.subr.mxu0 0.0
  %141 = vmatpush1.msra.mxu0 0.0
  %142 = vmatprep.subr.mxu0 0.0
  %143 = vmatpush1.msra.mxu0 0.0
  %144 = vmatprep.subr.mxu0 0.0
  %145 = vmatpush1.msra.mxu0 0.0
  %146 = vmatprep.subr.mxu0 0.0
  %147 = vmatpush1.msra.mxu0 0.0
  %148 = vmatprep.subr.mxu0 0.0
  %149 = vmatpush1.msra.mxu0 0.0
  %150 = vmatprep.subr.mxu0 0.0
  %151 = vmatpush1.msra.mxu0 0.0
  %152 = vmatprep.subr.mxu0 0.0
  %153 = vmatpush1.msra.mxu0 0.0
  %154 = vmatprep.subr.mxu0 0.0
  %155 = vmatpush1.msra.mxu0 0.0
  %156 = vmatprep.subr.mxu0 0.0
  %157 = vmatpush1.msra.mxu0 0.0
  %158 = vmatprep.subr.mxu0 0.0
  %159 = vmatpush1.msra.mxu0 0.0
  %160 = vmatprep.subr.mxu0 0.0
  %161 = vmatpush1.msra.mxu0 0.0
  %162 = vmatprep.subr.mxu0 0.0
  %163 = vmatpush1.msra.mxu0 0.0
  %164 = vmatprep.subr.mxu0 0.0
  %165 = vmatpush1.msra.mxu0 0.0
  %166 = vmatprep.subr.mxu0 0.0
  %167 = vmatpush1.msra.mxu0 0.0
  %168 = vmatprep.subr.mxu0 0.0
  %169 = vmatpush1.msra.mxu0 0.0
  %170 = vmatprep.subr.mxu0 0.0
  %171 = vmatpush1.msra.mxu0 0.0
  %172 = vmatprep.subr.mxu0 0.0
  %173 = vmatpush1.msra.mxu0 0.0
  %174 = vmatprep.subr.mxu0 0.0
  %175 = vmatpush1.msra.mxu0 0.0
  %176 = vmatprep.subr.mxu0 0.0
  %177 = vmatpush1.msra.mxu0 0.0
  %178 = vmatprep.subr.mxu0 0.0
  %179 = vmatpush1.msra.mxu0 0.0
  %180 = vmatprep.subr.mxu0 0.0
  %181 = vmatpush1.msra.mxu0 0.0
  %182 = vmatprep.subr.mxu0 0.0
  %183 = vmatpush1.msra.mxu0 0.0
  %184 = vmatprep.subr.mxu0 0.0
  %185 = vmatpush1.msra.mxu0 0.0
  %186 = vmatprep.subr.mxu0 0.0
  %187 = vmatpush1.msra.mxu0 0.0
  %188 = vmatprep.subr.mxu0 0.0
  %189 = vmatpush1.msra.mxu0 0.0
  %190 = vmatprep.subr.mxu0 0.0
  %191 = vmatpush1.msra.mxu0 0.0
  %192 = vmatprep.subr.mxu0 0.0
  %193 = vmatpush1.msra.mxu0 0.0
  %194 = vmatprep.subr.mxu0 0.0
  %195 = vmatpush1.msra.mxu0 0.0
  %196 = vmatprep.subr.mxu0 0.0
  %197 = vmatpush1.msra.mxu0 0.0
  %198 = vmatprep.subr.mxu0 0.0
  %199 = vmatpush1.msra.mxu0 0.0
  %200 = vmatprep.mubr.f32.mxu0 0.0
  %201 = vmatmul.mubr.f32.gmra.mrb[0].mxu0 %v134
  %v202 = vpop.f32.mrb[0].mxu0
  %v203 = vadd.f32 %v130, %v202
  %v204 = vpop.f32.mrb[0].mxu0
  %205 = vdwg.mxu0
  %v207 = vrot.slane %v203, 6
  %vm209 = vcmask 1041408
  %v210 = vsel %vm209, %v119, %v207
  %v211 = vld [vmem:[%s6] sm:$0xff]
  %v212 = vld [vmem:[%s6 + $0x8] sm:$0xff]
  %v213 = vld [vmem:[%s6 + $0x10] sm:$0xff]
  %v214 = vld [vmem:[%s6 + $0x18] sm:$0xff]
  %v215 = vld [vmem:[%s6 + $0x20] sm:$0xff]
  %v216 = vld [vmem:[%s6 + $0x28] sm:$0xff]
  %v217 = vld [vmem:[%s6 + $0x30] sm:$0xff]
  %v218 = vld [vmem:[%s6 + $0x38] sm:$0xff]
  %v219 = vld [vmem:[%s6 + $0x40] sm:$0xff]
  %v220 = vld [vmem:[%s6 + $0x48] sm:$0xff]
  %v221 = vld [vmem:[%s6 + $0x50] sm:$0xff]
  %v222 = vld [vmem:[%s6 + $0x58] sm:$0xff]
  %v223 = vld [vmem:[%s6 + $0x60] sm:$0xff]
  %v224 = vld [vmem:[%s6 + $0x68] sm:$0xff]
  %v225 = vld [vmem:[%s6 + $0x70] sm:$0xff]
  %v226 = vld [vmem:[%s6 + $0x78] sm:$0xff]
  %v227 = vld [vmem:[%s7] sm:$0x1]
  %v229 = vlaneseq
  %v230 = vshrl.u32 %v229, 7
  %v231 = vsub.s32 0, %v230
  %v232 = vrot.slane %v227, %v231
  %234 = vmatprep.subr.mxu0 0.0
  %235 = vmatpush1.msra.mxu0 %v211
  %236 = vmatprep.subr.mxu0 0.0
  %237 = vmatpush1.msra.mxu0 %v212
  %238 = vmatprep.subr.mxu0 0.0
  %239 = vmatpush1.msra.mxu0 %v213
  %240 = vmatprep.subr.mxu0 0.0
  %241 = vmatpush1.msra.mxu0 %v214
  %242 = vmatprep.subr.mxu0 0.0
  %243 = vmatpush1.msra.mxu0 %v215
  %244 = vmatprep.subr.mxu0 0.0
  %245 = vmatpush1.msra.mxu0 %v216
  %246 = vmatprep.subr.mxu0 0.0
  %247 = vmatpush1.msra.mxu0 %v217
  %248 = vmatprep.subr.mxu0 0.0
  %249 = vmatpush1.msra.mxu0 %v218
  %250 = vmatprep.subr.mxu0 0.0
  %251 = vmatpush1.msra.mxu0 %v219
  %252 = vmatprep.subr.mxu0 0.0
  %253 = vmatpush1.msra.mxu0 %v220
  %254 = vmatprep.subr.mxu0 0.0
  %255 = vmatpush1.msra.mxu0 %v221
  %256 = vmatprep.subr.mxu0 0.0
  %257 = vmatpush1.msra.mxu0 %v222
  %258 = vmatprep.subr.mxu0 0.0
  %259 = vmatpush1.msra.mxu0 %v223
  %260 = vmatprep.subr.mxu0 0.0
  %261 = vmatpush1.msra.mxu0 %v224
  %262 = vmatprep.subr.mxu0 0.0
  %263 = vmatpush1.msra.mxu0 %v225
  %264 = vmatprep.subr.mxu0 0.0
  %265 = vmatpush1.msra.mxu0 %v226
  %266 = vmatprep.subr.mxu0 0.0
  %267 = vmatpush1.msra.mxu0 0.0
  %268 = vmatprep.subr.mxu0 0.0
  %269 = vmatpush1.msra.mxu0 0.0
  %270 = vmatprep.subr.mxu0 0.0
  %271 = vmatpush1.msra.mxu0 0.0
  %272 = vmatprep.subr.mxu0 0.0
  %273 = vmatpush1.msra.mxu0 0.0
  %274 = vmatprep.subr.mxu0 0.0
  %275 = vmatpush1.msra.mxu0 0.0
  %276 = vmatprep.subr.mxu0 0.0
  %277 = vmatpush1.msra.mxu0 0.0
  %278 = vmatprep.subr.mxu0 0.0
  %279 = vmatpush1.msra.mxu0 0.0
  %280 = vmatprep.subr.mxu0 0.0
  %281 = vmatpush1.msra.mxu0 0.0
  %282 = vmatprep.subr.mxu0 0.0
  %283 = vmatpush1.msra.mxu0 0.0
  %284 = vmatprep.subr.mxu0 0.0
  %285 = vmatpush1.msra.mxu0 0.0
  %286 = vmatprep.subr.mxu0 0.0
  %287 = vmatpush1.msra.mxu0 0.0
  %288 = vmatprep.subr.mxu0 0.0
  %289 = vmatpush1.msra.mxu0 0.0
  %290 = vmatprep.subr.mxu0 0.0
  %291 = vmatpush1.msra.mxu0 0.0
  %292 = vmatprep.subr.mxu0 0.0
  %293 = vmatpush1.msra.mxu0 0.0
  %294 = vmatprep.subr.mxu0 0.0
  %295 = vmatpush1.msra.mxu0 0.0
  %296 = vmatprep.subr.mxu0 0.0
  %297 = vmatpush1.msra.mxu0 0.0
  %298 = vmatprep.mubr.f32.mxu0 0.0
  %299 = vmatmul.mubr.f32.gmra.mrb[0].mxu0 %v210
  %v300 = vpop.f32.mrb[0].mxu0
  %v301 = vadd.f32 %v232, %v300
  %v302 = vpop.f32.mrb[0].mxu0
  %303 = vdwg.mxu0
  %v304 = vtanh.pop %v301
  %v305 = vld [vmem:[%s8] sm:$0x1]
  %v307 = vlaneseq
  %v308 = vshrl.u32 %v307, 7
  %v309 = vsub.s32 0, %v308
  %v310 = vrot.slane %v305, %v309
  %v312 = vmul.f32 %v304, %v310
  %vm313 = vcmask 1043456
  %v314 = vsel %vm313, %v312, 0.0
  %315 = vadd.xlane.f32.xlu0 %v314
  %v316 = vpop.xlane.xlu0 %315
  %s317 = sld [smem:[#allocation2]]
  %v318 = vstv %s317
  %v319 = vadd.f32 %v316, %v318
  %v321 = vrot.slane %v319, 2
  %v323 = vmax.f32 %v319, %v321
  %v324 = vsub.f32 %v319, %v323
  %v325 = vmul.f32 %v324, 1.442695
  %v326 = vpow.pop %v325
  %v328 = vrot.slane %v323, 6
  %v330 = vsub.f32 %v319, %v328
  %v331 = vmul.f32 %v330, 1.442695
  %v332 = vpow.pop %v331
  %v334 = vrot.slane %v332, 2
  %v336 = vadd.f32 %v326, %v334
  %v337 = vrcp.pop %v336
  %v338 = vmul.f32 %v326, %v337
  %340 = vset.pattern.permute.xlu0 0
  %341 = vperm.xlu0 %340, %v338
  %v342 = vpop.permute.xlu0 %341
  %v344 = vmul.f32 %v119, %v342
  %v346 = vrot.slane %v337, 6
  %v348 = vmul.f32 %v332, %v346
  %350 = vset.pattern.permute.xlu0 0
  %351 = vperm.xlu0 %350, %v348
  %v352 = vpop.permute.xlu0 %351
  %v353 = vrot.slane %v352, 2
  %v355 = vmul.f32 %v203, %v353
  %v356 = vadd.f32 %v344, %v355
  %357 = vst [vmem:[%s10] sm:$0x3] %v356
  // Predicated region
  $region42: #{swin_resnet_att_forward.5} parent=0 // pred_check
    _
  $region43: #{swin_resnet_att_forward.5} parent=0 // pred_check_branch
    %359 = sbr.rel (0) target = $region45
  $region44: #{swin_resnet_att_forward.5} parent=0 // pred_region
    _
  $region45: #{swin_resnet_att_forward.5} parent=0 // pred_fallthru
    _
  // Predicated region
  $region46: #{swin_resnet_att_forward.5} parent=0 // pred_check
    _
  $region47: #{swin_resnet_att_forward.5} parent=0 // pred_check_branch
    %361 = sbr.rel (0) target = $region49
  $region48: #{swin_resnet_att_forward.5} parent=0 // pred_region
    _
  $region49: #{swin_resnet_att_forward.5} parent=0 // pred_fallthru
    _

</llo_original>
